<compile_context>
chip_gen: v7x
topology: tpu7x:2x2x1
jax: 0.10.0
libtpu: 0.0.40
codegen_flags: <defaults>
</compile_context>

<pallas_src>
import functools

import jax
import jax.numpy as jnp
from jax.experimental import pallas as pl
from jax.experimental.pallas import tpu as pltpu


def _round_up(n, m):
    return ((n + m - 1) // m) * m


def _han_attention_kernel(x_ref, w1_ref, b1_ref, w2_ref, b2_ref,
                          out_ref, alpha_ref, *,
                          s_valid, compute_dtype, lane_dense_softmax,
                          approx_recip):
    """One batch block.

    x_ref:     (Bb, Sp, Hp)  stream dtype (f32 or bf16)
    w1_ref:    (Hp, Hp)      first Linear weight, (in, out) layout, compute dtype
    b1_ref:    (1, Hp)       f32
    w2_ref:    (1, Hp)       second Linear weight as a row, f32
    b2_ref:    (1, 1)        f32
    out_ref:   (Bb, Hp)
    alpha_ref: (Bb, Sp)
    """
    Bb, Sp, Hp = x_ref.shape

    x = x_ref[...]
    # Leading-dim merge; the lane (last) dim is unchanged so this is a
    # layout-preserving view, not a relayout copy.
    x2 = x.reshape(Bb * Sp, Hp)

    # ---- fc[0]: Linear(H, H) on the MXU (compute-dtype operands, f32 acc) ---
    xm = x2.astype(compute_dtype)
    pre = (jnp.dot(xm, w1_ref[...], preferred_element_type=jnp.float32)
           + b1_ref[...])                               # (Bb*Sp, Hp) f32
    # tanh occupies the single EUP slot; bf16 roughly doubles its throughput
    # on v6e/v7x (use compute_dtype=float32 on v5e: no bf16 EUP/VPU there).
    h = jnp.tanh(pre.astype(compute_dtype))

    # ---- fc[2]: Linear(H, 1) as VPU multiply + lane reduce (f32 accumulate) -
    v2 = (jnp.sum(h * w2_ref[...], axis=-1, keepdims=True)
          + b2_ref[...])                                # (Bb*Sp, 1) f32

    if lane_dense_softmax:
        # One scalar per (b, s) relaid out lane-dense so max/exp/sum/scale run
        # on full-width vregs instead of 1/128-occupied (Bb, S, 1) vregs.
        v = v2.reshape(Bb, Sp)
        if s_valid < Sp:
            sidx = jax.lax.broadcasted_iota(jnp.int32, (Bb, Sp), 1)
            v = jnp.where(sidx < s_valid, v, -jnp.inf)   # mask padded S rows
        v_max = jnp.max(v, axis=-1, keepdims=True)       # (Bb, 1)
        e = jnp.exp(v - v_max)                           # (Bb, Sp) lane-dense
        denom = jnp.sum(e, axis=-1, keepdims=True)       # (Bb, 1)
        inv = (pl.reciprocal(denom, approx=True) if approx_recip
               else 1.0 / denom)
        alpha_ref[...] = (e * inv).astype(alpha_ref.dtype)
        weights = e[:, :, None]                          # (Bb, Sp, 1) f32
        inv2 = inv                                       # (Bb, 1)
    else:
        # Conservative fallback: softmax kept in the (Bb, Sp, 1) layout.
        v3 = v2.reshape(Bb, Sp, 1)
        if s_valid < Sp:
            sidx = jax.lax.broadcasted_iota(jnp.int32, (Bb, Sp, 1), 1)
            v3 = jnp.where(sidx < s_valid, v3, -jnp.inf)
        v_max = jnp.max(v3, axis=1, keepdims=True)       # (Bb, 1, 1)
        e3 = jnp.exp(v3 - v_max)                         # (Bb, Sp, 1)
        denom = jnp.sum(e3, axis=1, keepdims=True)       # (Bb, 1, 1)
        inv3 = (pl.reciprocal(denom, approx=True) if approx_recip
                else 1.0 / denom)
        alpha_ref[...] = (e3 * inv3).reshape(Bb, Sp).astype(alpha_ref.dtype)
        weights = e3
        inv2 = inv3.reshape(Bb, 1)

    # ---- weighted sum over S; 1/denom folded into the (Bb, Hp) result -------
    acc = jnp.sum(x * weights, axis=1)                   # (Bb, Hp) f32
    out_ref[...] = (acc * inv2).astype(out_ref.dtype)


def _vmem_bytes(bb, sp, hp, x_item, c_item, w1_bufs):
    """Honest per-step VMEM estimate (pre-act / tanh / cast temps included)."""
    elems = bb * sp * hp
    per_elem = (2 * x_item                               # x tile, double-buffered
                + (c_item if c_item != x_item else 0)    # cast copy for the MXU
                + 4                                      # pre-activation (f32)
                + (c_item if c_item != 4 else 0)         # tanh output copy
                + 4 + 4)                                 # h*w2 and x*e product temps
    small = 2 * bb * (hp + sp) * 4                       # out/alpha blocks (2 bufs)
    fixed = w1_bufs * hp * hp * c_item + 6 * hp * 4 + (2 << 20)
    return elems * per_elem + small + fixed


def _pick_block_b(batch, sp, hp, x_item, c_item, sublane, budget):
    bb = sublane
    b_cap = _round_up(batch, sublane)
    while True:
        nxt = bb + sublane
        if (nxt > b_cap
                or _vmem_bytes(nxt, sp, hp, x_item, c_item, 2) > budget
                or bb * sp * hp * x_item >= (4 << 20)):  # >= 4 MiB of x / step
            break
        bb = nxt
    # Keep >= 2 grid steps when the batch allows it (both v7x TCs get work).
    if batch > sublane:
        bb = min(bb, _round_up((batch + 1) // 2, sublane))
    return bb


def han_attention(x, w1, b1, w2, b2, *,
                  block_b=None,
                  compute_dtype=jnp.bfloat16,
                  stream_x_dtype=None,
                  pad_lanes=None,
                  vmem_budget_bytes=40 * 1024 * 1024):
    """HanAttention forward.

    x:  (B, S, H)
    w1: (H, H)  first Linear weight stored (in, out)  (== PyTorch weight.T)
    b1: (H,)
    w2: (H, 1), (1, H) or (H,)  second Linear weight
    b2: (1,) or scalar
    Returns (outputs (B, H), alphas (B, S)).
    """
    B, S, H = x.shape
    out_dtype = x.dtype
    compute_dtype = jnp.dtype(compute_dtype)
    approx_recip = compute_dtype != jnp.dtype(jnp.float32)

    # Optional 128-lane padding of S/H for unmasked output stores; auto-enable
    # only when it would inflate the dominant x traffic by <= 12.5%.
    sp128, hp128 = _round_up(S, 128), _round_up(H, 128)
    if pad_lanes is None:
        pad_lanes = (sp128 * hp128) * 8 <= (S * H) * 9
    Sp, Hp = (sp128, hp128) if pad_lanes else (S, H)

    x_s = x.astype(stream_x_dtype) if stream_x_dtype is not None else x
    x_item = jnp.dtype(x_s.dtype).itemsize
    c_item = compute_dtype.itemsize

    # block_b: largest batch block fitting the VMEM budget / bandwidth target.
    sublane = max(8, 32 // jnp.dtype(out_dtype).itemsize)  # 8 f32 / 16 bf16
    if block_b is None:
        block_b = _pick_block_b(B, Sp, Hp, x_item, c_item, sublane,
                                vmem_budget_bytes)
    block_b = _round_up(max(int(block_b), sublane), sublane)
    Bp = _round_up(B, block_b)

    vmem_est = _vmem_bytes(block_b, Sp, Hp, x_item, c_item, 2)
    vmem_limit = int(min(max(vmem_est, 32 << 20), 100 << 20))

    # Zero padding keeps the math exact: padded H rows/cols contribute 0 to v
    # and out, padded S rows are masked to -inf before the softmax.
    x_p = jnp.pad(x_s, ((0, Bp - B), (0, Sp - S), (0, Hp - H)))
    w1_p = jnp.pad(jnp.asarray(w1, compute_dtype), ((0, Hp - H), (0, Hp - H)))
    b1_p = jnp.pad(jnp.asarray(b1, jnp.float32).reshape(1, H),
                   ((0, 0), (0, Hp - H)))
    w2_p = jnp.pad(jnp.asarray(w2, jnp.float32).reshape(1, H),
                   ((0, 0), (0, Hp - H)))
    b2_p = jnp.asarray(b2, jnp.float32).reshape(1, 1)

    kern = functools.partial(
        _han_attention_kernel, s_valid=S, compute_dtype=compute_dtype,
        approx_recip=approx_recip)

    def run(single_buffer_weights, lane_dense):
        # Invariant operands never change block; single-buffer them to save
        # the dead second pipeline buffer (matters for large H on v7x).
        wkw = ({"pipeline_mode": pl.Buffered(1)} if single_buffer_weights
               else {})
        grid_spec = pltpu.PrefetchScalarGridSpec(
            num_scalar_prefetch=0,
            grid=(Bp // block_b,),
            in_specs=[
                pl.BlockSpec((block_b, Sp, Hp), lambda b: (b, 0, 0)),  # x
                pl.BlockSpec((Hp, Hp), lambda b: (0, 0), **wkw),       # w1
                pl.BlockSpec((1, Hp), lambda b: (0, 0), **wkw),        # b1
                pl.BlockSpec((1, Hp), lambda b: (0, 0), **wkw),        # w2
                pl.BlockSpec((1, 1), lambda b: (0, 0), **wkw),         # b2
            ],
            out_specs=[
                pl.BlockSpec((block_b, Hp), lambda b: (b, 0)),
                pl.BlockSpec((block_b, Sp), lambda b: (b, 0)),
            ])
        return pl.pallas_call(
            functools.partial(kern, lane_dense_softmax=lane_dense),
            out_shape=(jax.ShapeDtypeStruct((Bp, Hp), out_dtype),
                       jax.ShapeDtypeStruct((Bp, Sp), out_dtype)),
            grid_spec=grid_spec,
            compiler_params=pltpu.CompilerParams(
                dimension_semantics=("parallel",),
                vmem_limit_bytes=vmem_limit),
        )(x_p, w1_p, b1_p, w2_p, b2_p)

    # Preferred configuration first; fall back if pl.Buffered(1) or the
    # lane-dense softmax relayout does not lower on this jax/libtpu version.
    try:
        out, alphas = run(True, True)
    except Exception:                                     # noqa: BLE001
        try:
            out, alphas = run(False, True)
        except Exception:                                 # noqa: BLE001
            out, alphas = run(False, False)

    return out[:B, :H], alphas[:B, :S]


def han_attention_ref(x, w1, b1, w2, b2):
    """Pure-JAX reference matching the PyTorch forward (f32 throughout)."""
    v = (jnp.tanh(x @ w1 + b1) @ jnp.asarray(w2, jnp.float32).reshape(-1, 1)
         + jnp.asarray(b2, jnp.float32).reshape(1,))
    v = v[..., 0]                                        # (B, S)
    alphas = jax.nn.softmax(v, axis=1)                   # (B, S)
    outputs = jnp.sum(x * alphas[..., None], axis=1)     # (B, H)
    return outputs, alphas


if __name__ == "__main__":
    B, S, H = 2, 8, 32
    key = jax.random.PRNGKey(0)
    kx, k1, k2, k3, k4 = jax.random.split(key, 5)

    x = jax.random.normal(kx, (B, S, H), dtype=jnp.float32)

    # Deterministic parameter init (nn.Linear-style uniform bounds).
    bound = 1.0 / (H ** 0.5)
    # w1 stored (H_in, H_out) so the kernel does x @ w1 (== PyTorch x @ W.T).
    w1 = jax.random.uniform(k1, (H, H), jnp.float32, -bound, bound)
    b1 = jax.random.uniform(k2, (H,), jnp.float32, -bound, bound)
    w2 = jax.random.uniform(k3, (H, 1), jnp.float32, -bound, bound)
    b2 = jax.random.uniform(k4, (1,), jnp.float32, -bound, bound)

    ref_out, ref_alphas = han_attention_ref(x, w1, b1, w2, b2)

    # 1) Exact path (f32 operands, exact reciprocal): tight tolerance.
    out32, al32 = jax.block_until_ready(
        han_attention(x, w1, b1, w2, b2, compute_dtype=jnp.float32))
    assert jnp.allclose(out32, ref_out, atol=1e-5, rtol=1e-5)
    assert jnp.allclose(al32, ref_alphas, atol=1e-5, rtol=1e-5)

    # 2) Default fast path: bf16 MXU/tanh operands, f32 softmax/accumulation.
    out_bf, al_bf = jax.block_until_ready(han_attention(x, w1, b1, w2, b2))
    assert jnp.allclose(out_bf, ref_out, atol=5e-2, rtol=5e-2)
    assert jnp.allclose(al_bf, ref_alphas, atol=5e-2, rtol=5e-2)

    # 3) Mem-bound config: bf16 x streaming + forced 128-lane padding
    #    (exercises the padded-S softmax masking path).
    out_s, al_s = jax.block_until_ready(
        han_attention(x, w1, b1, w2, b2, stream_x_dtype=jnp.bfloat16,
                      pad_lanes=True))
    assert jnp.allclose(out_s, ref_out, atol=5e-2, rtol=5e-2)
    assert jnp.allclose(al_s, ref_alphas, atol=5e-2, rtol=5e-2)

    print("KERNEL_OK")
</pallas_src>

<mosaic_0001>
module attributes {stable_mosaic.version = 11 : i64} {
  func.func @_han_attention_kernel(%arg0: i32, %arg1: memref<8x8x32xf32, #tpu.memory_space<vmem>>, %arg2: memref<32x32xf32, #tpu.memory_space<vmem>>, %arg3: memref<1x32xf32, #tpu.memory_space<vmem>>, %arg4: memref<1x32xf32, #tpu.memory_space<vmem>>, %arg5: memref<1x1xf32, #tpu.memory_space<vmem>>, %arg6: memref<8x32xf32, #tpu.memory_space<vmem>>, %arg7: memref<8x8xf32, #tpu.memory_space<vmem>>) attributes {dimension_semantics = [#tpu.dimension_semantics<parallel>], iteration_bounds = array<i64: 1>, scalar_prefetch = 0 : i64, scratch_operands = 0 : i64, tpu.core_type = #tpu.core_type<tc>, window_params = [{transform_indices = @transform_0, window_bounds = array<i64: 8, 8, 32>}, {pipeline_mode = #tpu.pipeline_mode<synchronous>, transform_indices = @transform_1, window_bounds = array<i64: 32, 32>}, {pipeline_mode = #tpu.pipeline_mode<synchronous>, transform_indices = @transform_2, window_bounds = array<i64: 1, 32>}, {pipeline_mode = #tpu.pipeline_mode<synchronous>, transform_indices = @transform_3, window_bounds = array<i64: 1, 32>}, {pipeline_mode = #tpu.pipeline_mode<synchronous>, transform_indices = @transform_4, window_bounds = array<i64: 1, 1>}, {transform_indices = @transform_5, window_bounds = array<i64: 8, 32>}, {transform_indices = @transform_6, window_bounds = array<i64: 8, 8>}]} {
    %c0 = arith.constant 0 : index
    %c0_0 = arith.constant 0 : index
    %c0_1 = arith.constant 0 : index
    %0 = vector.load %arg1[%c0, %c0_0, %c0_1] : memref<8x8x32xf32, #tpu.memory_space<vmem>>, vector<8x8x32xf32>
    %1 = vector.shape_cast %0 : vector<8x8x32xf32> to vector<64x32xf32>
    %c0_2 = arith.constant 0 : index
    %c0_3 = arith.constant 0 : index
    %2 = vector.load %arg2[%c0_2, %c0_3] : memref<32x32xf32, #tpu.memory_space<vmem>>, vector<32x32xf32>
    %cst = arith.constant dense<0.000000e+00> : vector<64x32xf32>
    %3 = tpu.matmul %1, %2, %cst {dimension_numbers = #tpu.dot_dimension_numbers<[1], [0], [0], [1], [0, 0, 1, 1], [], []>} : vector<64x32xf32>, vector<32x32xf32>, vector<64x32xf32> -> vector<64x32xf32>
    %c0_4 = arith.constant 0 : index
    %c0_5 = arith.constant 0 : index
    %4 = vector.load %arg3[%c0_4, %c0_5] : memref<1x32xf32, #tpu.memory_space<vmem>>, vector<1x32xf32>
    %5 = vector.broadcast %4 : vector<1x32xf32> to vector<64x32xf32>
    %6 = arith.addf %3, %5 : vector<64x32xf32>
    %7 = math.tanh %6 : vector<64x32xf32>
    %c0_6 = arith.constant 0 : index
    %c0_7 = arith.constant 0 : index
    %8 = vector.load %arg4[%c0_6, %c0_7] : memref<1x32xf32, #tpu.memory_space<vmem>>, vector<1x32xf32>
    %9 = vector.broadcast %8 : vector<1x32xf32> to vector<64x32xf32>
    %10 = arith.mulf %7, %9 : vector<64x32xf32>
    %cst_8 = arith.constant dense<0.000000e+00> : vector<64xf32>
    %11 = vector.multi_reduction <add>, %10, %cst_8 [1] : vector<64x32xf32> to vector<64xf32>
    %12 = vector.shape_cast %11 : vector<64xf32> to vector<64x1xf32>
    %c0_9 = arith.constant 0 : index
    %c0_10 = arith.constant 0 : index
    %13 = vector.load %arg5[%c0_9, %c0_10] : memref<1x1xf32, #tpu.memory_space<vmem>>, vector<1x1xf32>
    %14 = vector.broadcast %13 : vector<1x1xf32> to vector<64x1xf32>
    %15 = arith.addf %12, %14 : vector<64x1xf32>
    %16 = vector.shape_cast %15 : vector<64x1xf32> to vector<8x8xf32>
    %cst_11 = arith.constant dense<0xFF800000> : vector<8xf32>
    %17 = vector.multi_reduction <maximumf>, %16, %cst_11 [1] : vector<8x8xf32> to vector<8xf32>
    %18 = vector.shape_cast %17 : vector<8xf32> to vector<8x1xf32>
    %19 = vector.broadcast %18 : vector<8x1xf32> to vector<8x8xf32>
    %20 = arith.subf %16, %19 : vector<8x8xf32>
    %21 = math.exp %20 : vector<8x8xf32>
    %cst_12 = arith.constant dense<0.000000e+00> : vector<8xf32>
    %22 = vector.multi_reduction <add>, %21, %cst_12 [1] : vector<8x8xf32> to vector<8xf32>
    %23 = vector.shape_cast %22 : vector<8xf32> to vector<8x1xf32>
    %cst_13 = arith.constant 1.000000e+00 : f32
    %24 = vector.broadcast %cst_13 : f32 to vector<8x1xf32>
    %25 = arith.divf %24, %23 : vector<8x1xf32>
    %26 = vector.broadcast %25 : vector<8x1xf32> to vector<8x8xf32>
    %27 = arith.mulf %21, %26 : vector<8x8xf32>
    %c0_14 = arith.constant 0 : index
    %c0_15 = arith.constant 0 : index
    %28 = vector.load %arg7[%c0_14, %c0_15] : memref<8x8xf32, #tpu.memory_space<vmem>>, vector<8x8xf32>
    tpu.vector_store %arg7[%c0_14, %c0_15], %27 {strides = array<i32>} : memref<8x8xf32, #tpu.memory_space<vmem>>, vector<8x8xf32>,
    %29 = vector.shape_cast %21 : vector<8x8xf32> to vector<8x8x1xf32>
    %30 = vector.broadcast %29 : vector<8x8x1xf32> to vector<8x8x32xf32>
    %31 = arith.mulf %0, %30 : vector<8x8x32xf32>
    %cst_16 = arith.constant dense<0.000000e+00> : vector<8x32xf32>
    %32 = vector.multi_reduction <add>, %31, %cst_16 [1] : vector<8x8x32xf32> to vector<8x32xf32>
    %33 = vector.broadcast %25 : vector<8x1xf32> to vector<8x32xf32>
    %34 = arith.mulf %32, %33 : vector<8x32xf32>
    %c0_17 = arith.constant 0 : index
    %c0_18 = arith.constant 0 : index
    %35 = vector.load %arg6[%c0_17, %c0_18] : memref<8x32xf32, #tpu.memory_space<vmem>>, vector<8x32xf32>
    tpu.vector_store %arg6[%c0_17, %c0_18], %34 {strides = array<i32>} : memref<8x32xf32, #tpu.memory_space<vmem>>, vector<8x32xf32>,
    return
  }
  func.func @transform_0(%arg0: i32) -> (i32, i32, i32) {
    %c0_i32 = arith.constant 0 : i32
    %c0_i32_0 = arith.constant 0 : i32
    %c0_i32_1 = arith.constant 0 : i32
    return %arg0, %c0_i32, %c0_i32_0 : i32, i32, i32
  }
  func.func @transform_1(%arg0: i32) -> (i32, i32) {
    %c0_i32 = arith.constant 0 : i32
    %c0_i32_0 = arith.constant 0 : i32
    %c0_i32_1 = arith.constant 0 : i32
    return %c0_i32, %c0_i32_0 : i32, i32
  }
  func.func @transform_2(%arg0: i32) -> (i32, i32) {
    %c0_i32 = arith.constant 0 : i32
    %c0_i32_0 = arith.constant 0 : i32
    %c0_i32_1 = arith.constant 0 : i32
    return %c0_i32, %c0_i32_0 : i32, i32
  }
  func.func @transform_3(%arg0: i32) -> (i32, i32) {
    %c0_i32 = arith.constant 0 : i32
    %c0_i32_0 = arith.constant 0 : i32
    %c0_i32_1 = arith.constant 0 : i32
    return %c0_i32, %c0_i32_0 : i32, i32
  }
  func.func @transform_4(%arg0: i32) -> (i32, i32) {
    %c0_i32 = arith.constant 0 : i32
    %c0_i32_0 = arith.constant 0 : i32
    %c0_i32_1 = arith.constant 0 : i32
    return %c0_i32, %c0_i32_0 : i32, i32
  }
  func.func @transform_5(%arg0: i32) -> (i32, i32) {
    %c0_i32 = arith.constant 0 : i32
    %c0_i32_0 = arith.constant 0 : i32
    return %arg0, %c0_i32 : i32, i32
  }
  func.func @transform_6(%arg0: i32) -> (i32, i32) {
    %c0_i32 = arith.constant 0 : i32
    %c0_i32_0 = arith.constant 0 : i32
    return %arg0, %c0_i32 : i32, i32
  }
}

module attributes {stable_mosaic.version = 11 : i64} {
  func.func @_han_attention_kernel(%arg0: i32, %arg1: memref<8x8x32xf32, #tpu.memory_space<vmem>>, %arg2: memref<32x32xf32, #tpu.memory_space<vmem>>, %arg3: memref<1x32xf32, #tpu.memory_space<vmem>>, %arg4: memref<1x32xf32, #tpu.memory_space<vmem>>, %arg5: memref<1x1xf32, #tpu.memory_space<vmem>>, %arg6: memref<8x32xf32, #tpu.memory_space<vmem>>, %arg7: memref<8x8xf32, #tpu.memory_space<vmem>>) attributes {dimension_semantics = [#tpu.dimension_semantics<parallel>], iteration_bounds = array<i64: 1>, scalar_prefetch = 0 : i64, scratch_operands = 0 : i64, tpu.core_type = #tpu.core_type<tc>, window_params = [{transform_indices = @transform_0, window_bounds = array<i64: 8, 8, 32>}, {pipeline_mode = #tpu.pipeline_mode<synchronous>, transform_indices = @transform_1, window_bounds = array<i64: 32, 32>}, {pipeline_mode = #tpu.pipeline_mode<synchronous>, transform_indices = @transform_2, window_bounds = array<i64: 1, 32>}, {pipeline_mode = #tpu.pipeline_mode<synchronous>, transform_indices = @transform_3, window_bounds = array<i64: 1, 32>}, {pipeline_mode = #tpu.pipeline_mode<synchronous>, transform_indices = @transform_4, window_bounds = array<i64: 1, 1>}, {transform_indices = @transform_5, window_bounds = array<i64: 8, 32>}, {transform_indices = @transform_6, window_bounds = array<i64: 8, 8>}]} {
    %c0 = arith.constant 0 : index
    %c0_0 = arith.constant 0 : index
    %c0_1 = arith.constant 0 : index
    %0 = vector.load %arg1[%c0, %c0_0, %c0_1] : memref<8x8x32xf32, #tpu.memory_space<vmem>>, vector<8x8x32xf32>
    %1 = vector.shape_cast %0 : vector<8x8x32xf32> to vector<64x32xf32>
    %c0_2 = arith.constant 0 : index
    %c0_3 = arith.constant 0 : index
    %2 = vector.load %arg2[%c0_2, %c0_3] : memref<32x32xf32, #tpu.memory_space<vmem>>, vector<32x32xf32>
    %cst = arith.constant dense<0.000000e+00> : vector<64x32xf32>
    %3 = tpu.matmul %1, %2, %cst {dimension_numbers = #tpu.dot_dimension_numbers<[1], [0], [0], [1], [0, 0, 1, 1], [], []>} : vector<64x32xf32>, vector<32x32xf32>, vector<64x32xf32> -> vector<64x32xf32>
    %c0_4 = arith.constant 0 : index
    %c0_5 = arith.constant 0 : index
    %4 = vector.load %arg3[%c0_4, %c0_5] : memref<1x32xf32, #tpu.memory_space<vmem>>, vector<1x32xf32>
    %5 = vector.broadcast %4 : vector<1x32xf32> to vector<64x32xf32>
    %6 = arith.addf %3, %5 : vector<64x32xf32>
    %7 = math.tanh %6 : vector<64x32xf32>
    %c0_6 = arith.constant 0 : index
    %c0_7 = arith.constant 0 : index
    %8 = vector.load %arg4[%c0_6, %c0_7] : memref<1x32xf32, #tpu.memory_space<vmem>>, vector<1x32xf32>
    %9 = vector.broadcast %8 : vector<1x32xf32> to vector<64x32xf32>
    %10 = arith.mulf %7, %9 : vector<64x32xf32>
    %cst_8 = arith.constant dense<0.000000e+00> : vector<64xf32>
    %11 = vector.multi_reduction <add>, %10, %cst_8 [1] : vector<64x32xf32> to vector<64xf32>
    %12 = vector.shape_cast %11 : vector<64xf32> to vector<64x1xf32>
    %c0_9 = arith.constant 0 : index
    %c0_10 = arith.constant 0 : index
    %13 = vector.load %arg5[%c0_9, %c0_10] : memref<1x1xf32, #tpu.memory_space<vmem>>, vector<1x1xf32>
    %14 = vector.broadcast %13 : vector<1x1xf32> to vector<64x1xf32>
    %15 = arith.addf %12, %14 : vector<64x1xf32>
    %16 = vector.shape_cast %15 : vector<64x1xf32> to vector<8x8xf32>
    %cst_11 = arith.constant dense<0xFF800000> : vector<8xf32>
    %17 = vector.multi_reduction <maximumf>, %16, %cst_11 [1] : vector<8x8xf32> to vector<8xf32>
    %18 = vector.shape_cast %17 : vector<8xf32> to vector<8x1xf32>
    %19 = vector.broadcast %18 : vector<8x1xf32> to vector<8x8xf32>
    %20 = arith.subf %16, %19 : vector<8x8xf32>
    %21 = math.exp %20 : vector<8x8xf32>
    %cst_12 = arith.constant dense<0.000000e+00> : vector<8xf32>
    %22 = vector.multi_reduction <add>, %21, %cst_12 [1] : vector<8x8xf32> to vector<8xf32>
    %23 = vector.shape_cast %22 : vector<8xf32> to vector<8x1xf32>
    %cst_13 = arith.constant 1.000000e+00 : f32
    %24 = vector.broadcast %cst_13 : f32 to vector<8x1xf32>
    %25 = arith.divf %24, %23 : vector<8x1xf32>
    %26 = vector.broadcast %25 : vector<8x1xf32> to vector<8x8xf32>
    %27 = arith.mulf %21, %26 : vector<8x8xf32>
    %c0_14 = arith.constant 0 : index
    %c0_15 = arith.constant 0 : index
    %28 = vector.load %arg7[%c0_14, %c0_15] : memref<8x8xf32, #tpu.memory_space<vmem>>, vector<8x8xf32>
    tpu.vector_store %arg7[%c0_14, %c0_15], %27 {strides = array<i32>} : memref<8x8xf32, #tpu.memory_space<vmem>>, vector<8x8xf32>,
    %29 = vector.shape_cast %21 : vector<8x8xf32> to vector<8x8x1xf32>
    %30 = vector.broadcast %29 : vector<8x8x1xf32> to vector<8x8x32xf32>
    %31 = arith.mulf %0, %30 : vector<8x8x32xf32>
    %cst_16 = arith.constant dense<0.000000e+00> : vector<8x32xf32>
    %32 = vector.multi_reduction <add>, %31, %cst_16 [1] : vector<8x8x32xf32> to vector<8x32xf32>
    %33 = vector.broadcast %25 : vector<8x1xf32> to vector<8x32xf32>
    %34 = arith.mulf %32, %33 : vector<8x32xf32>
    %c0_17 = arith.constant 0 : index
    %c0_18 = arith.constant 0 : index
    %35 = vector.load %arg6[%c0_17, %c0_18] : memref<8x32xf32, #tpu.memory_space<vmem>>, vector<8x32xf32>
    tpu.vector_store %arg6[%c0_17, %c0_18], %34 {strides = array<i32>} : memref<8x32xf32, #tpu.memory_space<vmem>>, vector<8x32xf32>,
    return
  }
  func.func @transform_0(%arg0: i32) -> (i32, i32, i32) {
    %c0_i32 = arith.constant 0 : i32
    %c0_i32_0 = arith.constant 0 : i32
    %c0_i32_1 = arith.constant 0 : i32
    return %arg0, %c0_i32, %c0_i32_0 : i32, i32, i32
  }
  func.func @transform_1(%arg0: i32) -> (i32, i32) {
    %c0_i32 = arith.constant 0 : i32
    %c0_i32_0 = arith.constant 0 : i32
    %c0_i32_1 = arith.constant 0 : i32
    return %c0_i32, %c0_i32_0 : i32, i32
  }
  func.func @transform_2(%arg0: i32) -> (i32, i32) {
    %c0_i32 = arith.constant 0 : i32
    %c0_i32_0 = arith.constant 0 : i32
    %c0_i32_1 = arith.constant 0 : i32
    return %c0_i32, %c0_i32_0 : i32, i32
  }
  func.func @transform_3(%arg0: i32) -> (i32, i32) {
    %c0_i32 = arith.constant 0 : i32
    %c0_i32_0 = arith.constant 0 : i32
    %c0_i32_1 = arith.constant 0 : i32
    return %c0_i32, %c0_i32_0 : i32, i32
  }
  func.func @transform_4(%arg0: i32) -> (i32, i32) {
    %c0_i32 = arith.constant 0 : i32
    %c0_i32_0 = arith.constant 0 : i32
    %c0_i32_1 = arith.constant 0 : i32
    return %c0_i32, %c0_i32_0 : i32, i32
  }
  func.func @transform_5(%arg0: i32) -> (i32, i32) {
    %c0_i32 = arith.constant 0 : i32
    %c0_i32_0 = arith.constant 0 : i32
    return %arg0, %c0_i32 : i32, i32
  }
  func.func @transform_6(%arg0: i32) -> (i32, i32) {
    %c0_i32 = arith.constant 0 : i32
    %c0_i32_0 = arith.constant 0 : i32
    return %arg0, %c0_i32 : i32, i32
  }
}

module attributes {stable_mosaic.version = 11 : i64} {
  func.func @_han_attention_kernel(%arg0: i32, %arg1: memref<8x8x32xf32, #tpu.memory_space<vmem>>, %arg2: memref<32x32xf32, #tpu.memory_space<vmem>>, %arg3: memref<1x32xf32, #tpu.memory_space<vmem>>, %arg4: memref<1x32xf32, #tpu.memory_space<vmem>>, %arg5: memref<1x1xf32, #tpu.memory_space<vmem>>, %arg6: memref<8x32xf32, #tpu.memory_space<vmem>>, %arg7: memref<8x8xf32, #tpu.memory_space<vmem>>) attributes {dimension_semantics = [#tpu.dimension_semantics<parallel>], iteration_bounds = array<i64: 1>, scalar_prefetch = 0 : i64, scratch_operands = 0 : i64, tpu.core_type = #tpu.core_type<tc>, window_params = [{transform_indices = @transform_0, window_bounds = array<i64: 8, 8, 32>}, {pipeline_mode = #tpu.pipeline_mode<synchronous>, transform_indices = @transform_1, window_bounds = array<i64: 32, 32>}, {pipeline_mode = #tpu.pipeline_mode<synchronous>, transform_indices = @transform_2, window_bounds = array<i64: 1, 32>}, {pipeline_mode = #tpu.pipeline_mode<synchronous>, transform_indices = @transform_3, window_bounds = array<i64: 1, 32>}, {pipeline_mode = #tpu.pipeline_mode<synchronous>, transform_indices = @transform_4, window_bounds = array<i64: 1, 1>}, {transform_indices = @transform_5, window_bounds = array<i64: 8, 32>}, {transform_indices = @transform_6, window_bounds = array<i64: 8, 8>}]} {
    %c0 = arith.constant 0 : index
    %c0_0 = arith.constant 0 : index
    %c0_1 = arith.constant 0 : index
    %0 = vector.load %arg1[%c0, %c0_0, %c0_1] : memref<8x8x32xf32, #tpu.memory_space<vmem>>, vector<8x8x32xf32>
    %1 = vector.shape_cast %0 : vector<8x8x32xf32> to vector<64x32xf32>
    %c0_2 = arith.constant 0 : index
    %c0_3 = arith.constant 0 : index
    %2 = vector.load %arg2[%c0_2, %c0_3] : memref<32x32xf32, #tpu.memory_space<vmem>>, vector<32x32xf32>
    %cst = arith.constant dense<0.000000e+00> : vector<64x32xf32>
    %3 = tpu.matmul %1, %2, %cst {dimension_numbers = #tpu.dot_dimension_numbers<[1], [0], [0], [1], [0, 0, 1, 1], [], []>} : vector<64x32xf32>, vector<32x32xf32>, vector<64x32xf32> -> vector<64x32xf32>
    %c0_4 = arith.constant 0 : index
    %c0_5 = arith.constant 0 : index
    %4 = vector.load %arg3[%c0_4, %c0_5] : memref<1x32xf32, #tpu.memory_space<vmem>>, vector<1x32xf32>
    %5 = vector.broadcast %4 : vector<1x32xf32> to vector<64x32xf32>
    %6 = arith.addf %3, %5 : vector<64x32xf32>
    %7 = math.tanh %6 : vector<64x32xf32>
    %c0_6 = arith.constant 0 : index
    %c0_7 = arith.constant 0 : index
    %8 = vector.load %arg4[%c0_6, %c0_7] : memref<1x32xf32, #tpu.memory_space<vmem>>, vector<1x32xf32>
    %9 = vector.broadcast %8 : vector<1x32xf32> to vector<64x32xf32>
    %10 = arith.mulf %7, %9 : vector<64x32xf32>
    %cst_8 = arith.constant dense<0.000000e+00> : vector<64xf32>
    %11 = vector.multi_reduction <add>, %10, %cst_8 [1] : vector<64x32xf32> to vector<64xf32>
    %12 = vector.shape_cast %11 : vector<64xf32> to vector<64x1xf32>
    %c0_9 = arith.constant 0 : index
    %c0_10 = arith.constant 0 : index
    %13 = vector.load %arg5[%c0_9, %c0_10] : memref<1x1xf32, #tpu.memory_space<vmem>>, vector<1x1xf32>
    %14 = vector.broadcast %13 : vector<1x1xf32> to vector<64x1xf32>
    %15 = arith.addf %12, %14 : vector<64x1xf32>
    %16 = vector.shape_cast %15 : vector<64x1xf32> to vector<8x8x1xf32>
    %cst_11 = arith.constant dense<0xFF800000> : vector<8x1xf32>
    %17 = vector.multi_reduction <maximumf>, %16, %cst_11 [1] : vector<8x8x1xf32> to vector<8x1xf32>
    %18 = vector.shape_cast %17 : vector<8x1xf32> to vector<8x1x1xf32>
    %19 = vector.broadcast %18 : vector<8x1x1xf32> to vector<8x8x1xf32>
    %20 = arith.subf %16, %19 : vector<8x8x1xf32>
    %21 = math.exp %20 : vector<8x8x1xf32>
    %cst_12 = arith.constant dense<0.000000e+00> : vector<8x1xf32>
    %22 = vector.multi_reduction <add>, %21, %cst_12 [1] : vector<8x8x1xf32> to vector<8x1xf32>
    %23 = vector.shape_cast %22 : vector<8x1xf32> to vector<8x1x1xf32>
    %cst_13 = arith.constant 1.000000e+00 : f32
    %24 = vector.broadcast %cst_13 : f32 to vector<8x1x1xf32>
    %25 = arith.divf %24, %23 : vector<8x1x1xf32>
    %26 = vector.broadcast %25 : vector<8x1x1xf32> to vector<8x8x1xf32>
    %27 = arith.mulf %21, %26 : vector<8x8x1xf32>
    %28 = vector.shape_cast %27 : vector<8x8x1xf32> to vector<8x8xf32>
    %c0_14 = arith.constant 0 : index
    %c0_15 = arith.constant 0 : index
    %29 = vector.load %arg7[%c0_14, %c0_15] : memref<8x8xf32, #tpu.memory_space<vmem>>, vector<8x8xf32>
    tpu.vector_store %arg7[%c0_14, %c0_15], %28 {strides = array<i32>} : memref<8x8xf32, #tpu.memory_space<vmem>>, vector<8x8xf32>,
    %30 = vector.shape_cast %25 : vector<8x1x1xf32> to vector<8x1xf32>
    %31 = vector.broadcast %21 : vector<8x8x1xf32> to vector<8x8x32xf32>
    %32 = arith.mulf %0, %31 : vector<8x8x32xf32>
    %cst_16 = arith.constant dense<0.000000e+00> : vector<8x32xf32>
    %33 = vector.multi_reduction <add>, %32, %cst_16 [1] : vector<8x8x32xf32> to vector<8x32xf32>
    %34 = vector.broadcast %30 : vector<8x1xf32> to vector<8x32xf32>
    %35 = arith.mulf %33, %34 : vector<8x32xf32>
    %c0_17 = arith.constant 0 : index
    %c0_18 = arith.constant 0 : index
    %36 = vector.load %arg6[%c0_17, %c0_18] : memref<8x32xf32, #tpu.memory_space<vmem>>, vector<8x32xf32>
    tpu.vector_store %arg6[%c0_17, %c0_18], %35 {strides = array<i32>} : memref<8x32xf32, #tpu.memory_space<vmem>>, vector<8x32xf32>,
    return
  }
  func.func @transform_0(%arg0: i32) -> (i32, i32, i32) {
    %c0_i32 = arith.constant 0 : i32
    %c0_i32_0 = arith.constant 0 : i32
    %c0_i32_1 = arith.constant 0 : i32
    return %arg0, %c0_i32, %c0_i32_0 : i32, i32, i32
  }
  func.func @transform_1(%arg0: i32) -> (i32, i32) {
    %c0_i32 = arith.constant 0 : i32
    %c0_i32_0 = arith.constant 0 : i32
    %c0_i32_1 = arith.constant 0 : i32
    return %c0_i32, %c0_i32_0 : i32, i32
  }
  func.func @transform_2(%arg0: i32) -> (i32, i32) {
    %c0_i32 = arith.constant 0 : i32
    %c0_i32_0 = arith.constant 0 : i32
    %c0_i32_1 = arith.constant 0 : i32
    return %c0_i32, %c0_i32_0 : i32, i32
  }
  func.func @transform_3(%arg0: i32) -> (i32, i32) {
    %c0_i32 = arith.constant 0 : i32
    %c0_i32_0 = arith.constant 0 : i32
    %c0_i32_1 = arith.constant 0 : i32
    return %c0_i32, %c0_i32_0 : i32, i32
  }
  func.func @transform_4(%arg0: i32) -> (i32, i32) {
    %c0_i32 = arith.constant 0 : i32
    %c0_i32_0 = arith.constant 0 : i32
    %c0_i32_1 = arith.constant 0 : i32
    return %c0_i32, %c0_i32_0 : i32, i32
  }
  func.func @transform_5(%arg0: i32) -> (i32, i32) {
    %c0_i32 = arith.constant 0 : i32
    %c0_i32_0 = arith.constant 0 : i32
    return %arg0, %c0_i32 : i32, i32
  }
  func.func @transform_6(%arg0: i32) -> (i32, i32) {
    %c0_i32 = arith.constant 0 : i32
    %c0_i32_0 = arith.constant 0 : i32
    return %arg0, %c0_i32 : i32, i32
  }
}

</mosaic_0001>

<llo_original>
// kernel: tpu_custom_call.1
$region0: #{tpu_custom_call.1}
  #allocation0 [shape = 'u32[]', space=smem, size = 0x4, offset = 0x4, fixed_abs, tag = 'smem constant byte address 0x4 - core index']
  #allocation1 [shape = 'u32[144,128]{1,0:T(1,128)}', space=vmem, size = 0x12000, scoped, tag = 'internal scratch']
  #allocation2 [shape = 'f32[1,1]{1,0:T(1,128)S(1)}', space=vmem, size = 0x200, scoped, tag = 'scoped memory for tpu_custom_call.1']
  %s0 = inlined_call_operand.hbm [shape: f32[8,8,32], index: 0, kind: input, shape index: {}]
  %s1 = inlined_call_operand.hbm [shape: f32[32,32], index: 1, kind: input, shape index: {}]
  %s2 = inlined_call_operand.vmem [shape: f32[1,32], index: 2, kind: input, shape index: {}]
  %s3 = inlined_call_operand.vmem [shape: f32[1,32], index: 3, kind: input, shape index: {}]
  %s4 = inlined_call_operand.<no memory space> [shape: f32[1,1], index: 4, kind: input, shape index: {}]
  %s5 = inlined_call_operand.hbm [shape: f32[8,32], index: 5, kind: output, shape index: {0}]
  %s6 = inlined_call_operand.hbm [shape: f32[8,8], index: 6, kind: output, shape index: {1}]
  %7 = xla_tuple %s5, %s6
  %s8 = sld [smem:[#allocation0]]
  $region46: #{tpu_custom_call.1} parent=0
    _
  %s10 = ssub.s32 1, %s8
  %s11 = scalar_select 0, %s10, %s8
  %v12 = vstv %s4
  %13 = vst [vmem:[#allocation2] sm:$0x1] %v12
  $region1: #{tpu_custom_call.1} parent=0
    #allocation3 [shape = 'u8[32768]{0}', space=vmem, size = 0x8000, scoped, tag = 'input window, operand 0, single buffered']
    #allocation4 [shape = 's32[1]{0}', space=sflag, size = 0x4, scoped, tag = 'scoped memory for tpu_custom_call.1']
    #allocation5 [shape = 's32[1]{0}', space=sflag, size = 0x4, scoped, tag = 'scoped memory for tpu_custom_call.1']
    #allocation6 [shape = 'u8[16384]{0}', space=vmem, size = 0x4000, scoped, tag = 'input window, operand 1, single buffered']
    #allocation7 [shape = 's32[1]{0}', space=sflag, size = 0x4, scoped, tag = 'scoped memory for tpu_custom_call.1']
    #allocation8 [shape = 'u8[4096]{0}', space=vmem, size = 0x1000, scoped, tag = 'output window, operand 0, single buffered']
    #allocation9 [shape = 'u8[4096]{0}', space=vmem, size = 0x1000, scoped, tag = 'output window, operand 1, single buffered']
    #allocation10 [shape = 's32[1]{0}', space=sflag, size = 0x4, scoped, tag = 'scoped memory for tpu_custom_call.1']
    %14 = vsyncpa [#allocation4], 0
    %15 = vsyncpa [#allocation7], 0
    %16 = vsyncpa [#allocation5], 0
    %17 = vsyncpa [#allocation10], 0
    // Predicated region
    $region2: #{tpu_custom_call.1} parent=1 // pred_check
      _
    $region3: #{tpu_custom_call.1} parent=1 // pred_check_branch
      %19 = sbr.rel (0) target = $region5
    $region4: #{tpu_custom_call.1} parent=1 // pred_region
      %s21 = ssub.s32 1024, 1024
      %22 = vsyncadd [#allocation4], %s21
      %s23 = sshll.u32 [#allocation3], 4
      %s24 = int_to_ptr.vmem [resolvable:$true] %s23
      %29 = dma.hbm_to_vmem [thread:$0]  %s0, 1024, %s24, [#allocation4], 128, 128, 8
    $region5: #{tpu_custom_call.1} parent=1 // pred_fallthru
      _
    // Predicated region
    $region6: #{tpu_custom_call.1} parent=1 // pred_check
      _
    $region7: #{tpu_custom_call.1} parent=1 // pred_check_branch
      %31 = sbr.rel (0) target = $region9
    $region8: #{tpu_custom_call.1} parent=1 // pred_region
      %s33 = ssub.s32 512, 512
      %34 = vsyncadd [#allocation7], %s33
      %s35 = sshll.u32 [#allocation6], 4
      %s36 = int_to_ptr.vmem [resolvable:$true] %s35
      %41 = dma.hbm_to_vmem [thread:$0]  %s1, 512, %s36, [#allocation7], 128, 128, 8
    $region9: #{tpu_custom_call.1} parent=1 // pred_fallthru
      _
    // Predicated region
    $region10: #{tpu_custom_call.1} parent=1 // pred_check
      _
    $region11: #{tpu_custom_call.1} parent=1 // pred_check_branch
      %43 = sbr.rel (0) target = $region13
    $region12: #{tpu_custom_call.1} parent=1 // pred_region
      _
    $region13: #{tpu_custom_call.1} parent=1 // pred_fallthru
      _
    // Predicated region
    $region14: #{tpu_custom_call.1} parent=1 // pred_check
      _
    $region15: #{tpu_custom_call.1} parent=1 // pred_check_branch
      %45 = sbr.rel (0) target = $region17
    $region16: #{tpu_custom_call.1} parent=1 // pred_region
      _
    $region17: #{tpu_custom_call.1} parent=1 // pred_fallthru
      _
    // Predicated region
    $region18: #{tpu_custom_call.1} parent=1 // pred_check
      _
    $region19: #{tpu_custom_call.1} parent=1 // pred_check_branch
      %47 = sbr.rel (0) target = $region21
    $region20: #{tpu_custom_call.1} parent=1 // pred_region
      _
    $region21: #{tpu_custom_call.1} parent=1 // pred_fallthru
      _
    // Predicated region
    $region22: #{tpu_custom_call.1} parent=1 // pred_check
      _
    $region23: #{tpu_custom_call.1} parent=1 // pred_check_branch
      %49 = sbr.rel (0) target = $region25
    $region24: #{tpu_custom_call.1} parent=1 // pred_region
      %50 = dma.done [#allocation4], 1024
    $region25: #{tpu_custom_call.1} parent=1 // pred_fallthru
      _
    // Predicated region
    $region26: #{tpu_custom_call.1} parent=1 // pred_check
      _
    $region27: #{tpu_custom_call.1} parent=1 // pred_check_branch
      %52 = sbr.rel (0) target = $region29
    $region28: #{tpu_custom_call.1} parent=1 // pred_region
      %53 = dma.done [#allocation7], 512
    $region29: #{tpu_custom_call.1} parent=1 // pred_fallthru
      _
    %v54 = vld [vmem:[#allocation3] sm:$0xff]
    %v55 = vld [vmem:[#allocation3 + $0x8] sm:$0xff]
    %v56 = vld [vmem:[#allocation3 + $0x10] sm:$0xff]
    %v57 = vld [vmem:[#allocation3 + $0x18] sm:$0xff]
    %v58 = vld [vmem:[#allocation3 + $0x20] sm:$0xff]
    %v59 = vld [vmem:[#allocation3 + $0x28] sm:$0xff]
    %v60 = vld [vmem:[#allocation3 + $0x30] sm:$0xff]
    %v61 = vld [vmem:[#allocation3 + $0x38] sm:$0xff]
    %v62 = vld [vmem:[#allocation6] sm:$0xff]
    %v63 = vld [vmem:[#allocation6 + $0x8] sm:$0xff]
    %v64 = vld [vmem:[#allocation6 + $0x10] sm:$0xff]
    %v65 = vld [vmem:[#allocation6 + $0x18] sm:$0xff]
    %v66 = vld [vmem:[%s2] sm:$0x1]
    %v68 = vlaneseq
    %v69 = vshrl.u32 %v68, 7
    %v70 = vsub.s32 0, %v69
    %v71 = vrot.slane %v66, %v70
    %vm73 = vcmask 261120
    %v75 = vsel %vm73, %v54, 0
    %v78 = vsel %vm73, %v55, 0
    %v81 = vsel %vm73, %v56, 0
    %v84 = vsel %vm73, %v57, 0
    %v87 = vsel %vm73, %v58, 0
    %v90 = vsel %vm73, %v59, 0
    %v93 = vsel %vm73, %v60, 0
    %v96 = vsel %vm73, %v61, 0
    %98 = vmatprep.subr.mxu0 0.0
    %99 = vmatpush1.msra.mxu0 %v62
    %100 = vmatprep.subr.mxu0 0.0
    %101 = vmatpush1.msra.mxu0 %v63
    %102 = vmatprep.subr.mxu0 0.0
    %103 = vmatpush1.msra.mxu0 %v64
    %104 = vmatprep.subr.mxu0 0.0
    %105 = vmatpush1.msra.mxu0 %v65
    %106 = vmatprep.subr.mxu0 0.0
    %107 = vmatpush1.msra.mxu0 0.0
    %108 = vmatprep.subr.mxu0 0.0
    %109 = vmatpush1.msra.mxu0 0.0
    %110 = vmatprep.subr.mxu0 0.0
    %111 = vmatpush1.msra.mxu0 0.0
    %112 = vmatprep.subr.mxu0 0.0
    %113 = vmatpush1.msra.mxu0 0.0
    %114 = vmatprep.subr.mxu0 0.0
    %115 = vmatpush1.msra.mxu0 0.0
    %116 = vmatprep.subr.mxu0 0.0
    %117 = vmatpush1.msra.mxu0 0.0
    %118 = vmatprep.subr.mxu0 0.0
    %119 = vmatpush1.msra.mxu0 0.0
    %120 = vmatprep.subr.mxu0 0.0
    %121 = vmatpush1.msra.mxu0 0.0
    %122 = vmatprep.subr.mxu0 0.0
    %123 = vmatpush1.msra.mxu0 0.0
    %124 = vmatprep.subr.mxu0 0.0
    %125 = vmatpush1.msra.mxu0 0.0
    %126 = vmatprep.subr.mxu0 0.0
    %127 = vmatpush1.msra.mxu0 0.0
    %128 = vmatprep.subr.mxu0 0.0
    %129 = vmatpush1.msra.mxu0 0.0
    %130 = vmatprep.subr.mxu0 0.0
    %131 = vmatpush1.msra.mxu0 0.0
    %132 = vmatprep.subr.mxu0 0.0
    %133 = vmatpush1.msra.mxu0 0.0
    %134 = vmatprep.subr.mxu0 0.0
    %135 = vmatpush1.msra.mxu0 0.0
    %136 = vmatprep.subr.mxu0 0.0
    %137 = vmatpush1.msra.mxu0 0.0
    %138 = vmatprep.subr.mxu0 0.0
    %139 = vmatpush1.msra.mxu0 0.0
    %140 = vmatprep.subr.mxu0 0.0
    %141 = vmatpush1.msra.mxu0 0.0
    %142 = vmatprep.subr.mxu0 0.0
    %143 = vmatpush1.msra.mxu0 0.0
    %144 = vmatprep.subr.mxu0 0.0
    %145 = vmatpush1.msra.mxu0 0.0
    %146 = vmatprep.subr.mxu0 0.0
    %147 = vmatpush1.msra.mxu0 0.0
    %148 = vmatprep.subr.mxu0 0.0
    %149 = vmatpush1.msra.mxu0 0.0
    %150 = vmatprep.subr.mxu0 0.0
    %151 = vmatpush1.msra.mxu0 0.0
    %152 = vmatprep.subr.mxu0 0.0
    %153 = vmatpush1.msra.mxu0 0.0
    %154 = vmatprep.subr.mxu0 0.0
    %155 = vmatpush1.msra.mxu0 0.0
    %156 = vmatprep.subr.mxu0 0.0
    %157 = vmatpush1.msra.mxu0 0.0
    %158 = vmatprep.subr.mxu0 0.0
    %159 = vmatpush1.msra.mxu0 0.0
    %160 = vmatprep.subr.mxu0 0.0
    %161 = vmatpush1.msra.mxu0 0.0
    %162 = vmatprep.mubr.f32.mxu0 0.0
    %163 = vmatmul.mubr.f32.gmra.mrb[0].mxu0 %v75
    %v164 = vpop.f32.mrb[0].mxu0
    %v165 = vadd.f32 %v71, %v164
    %v166 = vpop.f32.mrb[0].mxu0
    %167 = vmatprep.mubr.f32.mxu0 0.0
    %168 = vmatmul.mubr.f32.gmra.mrb[0].mxu0 %v78
    %v169 = vpop.f32.mrb[0].mxu0
    %v170 = vadd.f32 %v71, %v169
    %v171 = vpop.f32.mrb[0].mxu0
    %172 = vmatprep.mubr.f32.mxu0 0.0
    %173 = vmatmul.mubr.f32.gmra.mrb[0].mxu0 %v81
    %v174 = vpop.f32.mrb[0].mxu0
    %v175 = vadd.f32 %v71, %v174
    %v176 = vpop.f32.mrb[0].mxu0
    %177 = vmatprep.mubr.f32.mxu0 0.0
    %178 = vmatmul.mubr.f32.gmra.mrb[0].mxu0 %v84
    %v179 = vpop.f32.mrb[0].mxu0
    %v180 = vadd.f32 %v71, %v179
    %v181 = vpop.f32.mrb[0].mxu0
    %182 = vmatprep.mubr.f32.mxu0 0.0
    %183 = vmatmul.mubr.f32.gmra.mrb[0].mxu0 %v87
    %v184 = vpop.f32.mrb[0].mxu0
    %v185 = vadd.f32 %v71, %v184
    %v186 = vpop.f32.mrb[0].mxu0
    %187 = vmatprep.mubr.f32.mxu0 0.0
    %188 = vmatmul.mubr.f32.gmra.mrb[0].mxu0 %v90
    %v189 = vpop.f32.mrb[0].mxu0
    %v190 = vadd.f32 %v71, %v189
    %v191 = vpop.f32.mrb[0].mxu0
    %192 = vmatprep.mubr.f32.mxu0 0.0
    %193 = vmatmul.mubr.f32.gmra.mrb[0].mxu0 %v93
    %v194 = vpop.f32.mrb[0].mxu0
    %v195 = vadd.f32 %v71, %v194
    %v196 = vpop.f32.mrb[0].mxu0
    %197 = vmatprep.mubr.f32.mxu0 0.0
    %198 = vmatmul.mubr.f32.gmra.mrb[0].mxu0 %v96
    %v199 = vpop.f32.mrb[0].mxu0
    %v200 = vadd.f32 %v71, %v199
    %v201 = vpop.f32.mrb[0].mxu0
    %202 = vdwg.mxu0
    %v203 = vtanh.pop %v165
    %v204 = vtanh.pop %v170
    %v205 = vtanh.pop %v175
    %v206 = vtanh.pop %v180
    %v207 = vtanh.pop %v185
    %v208 = vtanh.pop %v190
    %v209 = vtanh.pop %v195
    %v210 = vtanh.pop %v200
    %v211 = vld [vmem:[%s3] sm:$0x1]
    %v213 = vlaneseq
    %v214 = vshrl.u32 %v213, 7
    %v215 = vsub.s32 0, %v214
    %v216 = vrot.slane %v211, %v215
    %v218 = vmul.f32 %v203, %v216
    %v219 = vmul.f32 %v204, %v216
    %v220 = vmul.f32 %v205, %v216
    %v221 = vmul.f32 %v206, %v216
    %v222 = vmul.f32 %v207, %v216
    %v223 = vmul.f32 %v208, %v216
    %v224 = vmul.f32 %v209, %v216
    %v225 = vmul.f32 %v210, %v216
    %v226 = vsel %vm73, %v218, 0.0
    %227 = vadd.xlane.f32.xlu0 %v226
    %v228 = vpop.xlane.xlu0 %227
    %v229 = vsel %vm73, %v219, 0.0
    %230 = vadd.xlane.f32.xlu0 %v229
    %v231 = vpop.xlane.xlu0 %230
    %v232 = vsel %vm73, %v220, 0.0
    %233 = vadd.xlane.f32.xlu0 %v232
    %v234 = vpop.xlane.xlu0 %233
    %v235 = vsel %vm73, %v221, 0.0
    %236 = vadd.xlane.f32.xlu0 %v235
    %v237 = vpop.xlane.xlu0 %236
    %v238 = vsel %vm73, %v222, 0.0
    %239 = vadd.xlane.f32.xlu0 %v238
    %v240 = vpop.xlane.xlu0 %239
    %v241 = vsel %vm73, %v223, 0.0
    %242 = vadd.xlane.f32.xlu0 %v241
    %v243 = vpop.xlane.xlu0 %242
    %v244 = vsel %vm73, %v224, 0.0
    %245 = vadd.xlane.f32.xlu0 %v244
    %v246 = vpop.xlane.xlu0 %245
    %v247 = vsel %vm73, %v225, 0.0
    %248 = vadd.xlane.f32.xlu0 %v247
    %v249 = vpop.xlane.xlu0 %248
    %v250 = vld [vmem:[#allocation2] sm:$0x1]
    %v252 = vlaneseq
    %v253 = vshrl.u32 %v252, 7
    %v254 = vsub.s32 0, %v253
    %v255 = vrot.slane %v250, %v254
    %v257 = vadd.f32 %v228, %v255
    %v258 = vadd.f32 %v231, %v255
    %v259 = vadd.f32 %v234, %v255
    %v260 = vadd.f32 %v237, %v255
    %v261 = vadd.f32 %v240, %v255
    %v262 = vadd.f32 %v243, %v255
    %v263 = vadd.f32 %v246, %v255
    %v264 = vadd.f32 %v249, %v255
    %273 = vset.pattern.permute.xlu0 0
    %274 = vperm.xlu0 %273, %v257
    %v275 = vpop.permute.xlu0 %274
    %276 = vset.pattern.permute.xlu0 0
    %277 = vperm.xlu0 %276, %v258
    %v278 = vpop.permute.xlu0 %277
    %279 = vset.pattern.permute.xlu0 0
    %280 = vperm.xlu0 %279, %v259
    %v281 = vpop.permute.xlu0 %280
    %282 = vset.pattern.permute.xlu0 0
    %283 = vperm.xlu0 %282, %v260
    %v284 = vpop.permute.xlu0 %283
    %285 = vset.pattern.permute.xlu0 0
    %286 = vperm.xlu0 %285, %v261
    %v287 = vpop.permute.xlu0 %286
    %288 = vset.pattern.permute.xlu0 0
    %289 = vperm.xlu0 %288, %v262
    %v290 = vpop.permute.xlu0 %289
    %291 = vset.pattern.permute.xlu0 0
    %292 = vperm.xlu0 %291, %v263
    %v293 = vpop.permute.xlu0 %292
    %294 = vset.pattern.permute.xlu0 0
    %295 = vperm.xlu0 %294, %v264
    %v296 = vpop.permute.xlu0 %295
    %v297 = vlaneseq
    %v298 = vand.u32 %v297, 127
    %v299 = vlaneseq
    %v300 = vshrl.u32 %v299, 7
    %v301 = vsub.s32 %v298, %v300
    %v302 = vrot.slane %v275, %v301
    %v303 = vlaneseq
    %v304 = vshrl.u32 %v303, 7
    %v305 = vsub.s32 %v298, %v304
    %v306 = vrot.slane %v278, %v305
    %v307 = vlaneseq
    %v308 = vshrl.u32 %v307, 7
    %v309 = vsub.s32 %v298, %v308
    %v310 = vrot.slane %v281, %v309
    %v311 = vlaneseq
    %v312 = vshrl.u32 %v311, 7
    %v313 = vsub.s32 %v298, %v312
    %v314 = vrot.slane %v284, %v313
    %v315 = vlaneseq
    %v316 = vshrl.u32 %v315, 7
    %v317 = vsub.s32 %v298, %v316
    %v318 = vrot.slane %v287, %v317
    %v319 = vlaneseq
    %v320 = vshrl.u32 %v319, 7
    %v321 = vsub.s32 %v298, %v320
    %v322 = vrot.slane %v290, %v321
    %v323 = vlaneseq
    %v324 = vshrl.u32 %v323, 7
    %v325 = vsub.s32 %v298, %v324
    %v326 = vrot.slane %v293, %v325
    %v327 = vlaneseq
    %v328 = vshrl.u32 %v327, 7
    %v329 = vsub.s32 %v298, %v328
    %v330 = vrot.slane %v296, %v329
    %vm331 = vcmask 1041409
    %v332 = vsel %vm331, %v306, %v302
    %vm333 = vcmask 1042434
    %v334 = vsel %vm333, %v310, %v332
    %vm335 = vcmask 1043459
    %v336 = vsel %vm335, %v314, %v334
    %vm337 = vcmask 1044484
    %v338 = vsel %vm337, %v318, %v336
    %vm339 = vcmask 1045509
    %v340 = vsel %vm339, %v322, %v338
    %vm341 = vcmask 1046534
    %v342 = vsel %vm341, %v326, %v340
    %vm343 = vcmask 1047559
    %v344 = vsel %vm343, %v330, %v342
    %vm346 = vcmask 64512
    %v347 = vsel %vm346, %v344, -inf
    %348 = vmax.xlane.f32.xlu0 %v347
    %v349 = vpop.xlane.xlu0 %348
    %v351 = vlaneseq
    %v352 = vshrl.u32 %v351, 7
    %v353 = vsub.s32 0, %v352
    %v354 = vrot.slane %v349, %v353
    %v355 = vlaneseq
    %v356 = vshrl.u32 %v355, 7
    %v357 = vsub.s32 1, %v356
    %v358 = vrot.slane %v349, %v357
    %v359 = vlaneseq
    %v360 = vshrl.u32 %v359, 7
    %v361 = vsub.s32 2, %v360
    %v362 = vrot.slane %v349, %v361
    %v363 = vlaneseq
    %v364 = vshrl.u32 %v363, 7
    %v365 = vsub.s32 3, %v364
    %v366 = vrot.slane %v349, %v365
    %v367 = vlaneseq
    %v368 = vshrl.u32 %v367, 7
    %v369 = vsub.s32 4, %v368
    %v370 = vrot.slane %v349, %v369
    %v371 = vlaneseq
    %v372 = vshrl.u32 %v371, 7
    %v373 = vsub.s32 5, %v372
    %v374 = vrot.slane %v349, %v373
    %v375 = vlaneseq
    %v376 = vshrl.u32 %v375, 7
    %v377 = vsub.s32 6, %v376
    %v378 = vrot.slane %v349, %v377
    %v379 = vlaneseq
    %v380 = vshrl.u32 %v379, 7
    %v381 = vsub.s32 7, %v380
    %v382 = vrot.slane %v349, %v381
    %v391 = vsub.f32 %v257, %v354
    %v392 = vsub.f32 %v258, %v358
    %v393 = vsub.f32 %v259, %v362
    %v394 = vsub.f32 %v260, %v366
    %v395 = vsub.f32 %v261, %v370
    %v396 = vsub.f32 %v262, %v374
    %v397 = vsub.f32 %v263, %v378
    %v398 = vsub.f32 %v264, %v382
    %v399 = vmul.f32 %v391, 1.442695
    %v400 = vpow.pop %v399
    %v401 = vmul.f32 %v392, 1.442695
    %v402 = vpow.pop %v401
    %v403 = vmul.f32 %v393, 1.442695
    %v404 = vpow.pop %v403
    %v405 = vmul.f32 %v394, 1.442695
    %v406 = vpow.pop %v405
    %v407 = vmul.f32 %v395, 1.442695
    %v408 = vpow.pop %v407
    %v409 = vmul.f32 %v396, 1.442695
    %v410 = vpow.pop %v409
    %v411 = vmul.f32 %v397, 1.442695
    %v412 = vpow.pop %v411
    %v413 = vmul.f32 %v398, 1.442695
    %v414 = vpow.pop %v413
    %423 = vset.pattern.permute.xlu0 0
    %424 = vperm.xlu0 %423, %v400
    %v425 = vpop.permute.xlu0 %424
    %426 = vset.pattern.permute.xlu0 0
    %427 = vperm.xlu0 %426, %v402
    %v428 = vpop.permute.xlu0 %427
    %429 = vset.pattern.permute.xlu0 0
    %430 = vperm.xlu0 %429, %v404
    %v431 = vpop.permute.xlu0 %430
    %432 = vset.pattern.permute.xlu0 0
    %433 = vperm.xlu0 %432, %v406
    %v434 = vpop.permute.xlu0 %433
    %435 = vset.pattern.permute.xlu0 0
    %436 = vperm.xlu0 %435, %v408
    %v437 = vpop.permute.xlu0 %436
    %438 = vset.pattern.permute.xlu0 0
    %439 = vperm.xlu0 %438, %v410
    %v440 = vpop.permute.xlu0 %439
    %441 = vset.pattern.permute.xlu0 0
    %442 = vperm.xlu0 %441, %v412
    %v443 = vpop.permute.xlu0 %442
    %444 = vset.pattern.permute.xlu0 0
    %445 = vperm.xlu0 %444, %v414
    %v446 = vpop.permute.xlu0 %445
    %v447 = vlaneseq
    %v448 = vshrl.u32 %v447, 7
    %v449 = vsub.s32 %v298, %v448
    %v450 = vrot.slane %v425, %v449
    %v451 = vlaneseq
    %v452 = vshrl.u32 %v451, 7
    %v453 = vsub.s32 %v298, %v452
    %v454 = vrot.slane %v428, %v453
    %v455 = vlaneseq
    %v456 = vshrl.u32 %v455, 7
    %v457 = vsub.s32 %v298, %v456
    %v458 = vrot.slane %v431, %v457
    %v459 = vlaneseq
    %v460 = vshrl.u32 %v459, 7
    %v461 = vsub.s32 %v298, %v460
    %v462 = vrot.slane %v434, %v461
    %v463 = vlaneseq
    %v464 = vshrl.u32 %v463, 7
    %v465 = vsub.s32 %v298, %v464
    %v466 = vrot.slane %v437, %v465
    %v467 = vlaneseq
    %v468 = vshrl.u32 %v467, 7
    %v469 = vsub.s32 %v298, %v468
    %v470 = vrot.slane %v440, %v469
    %v471 = vlaneseq
    %v472 = vshrl.u32 %v471, 7
    %v473 = vsub.s32 %v298, %v472
    %v474 = vrot.slane %v443, %v473
    %v475 = vlaneseq
    %v476 = vshrl.u32 %v475, 7
    %v477 = vsub.s32 %v298, %v476
    %v478 = vrot.slane %v446, %v477
    %v479 = vsel %vm331, %v454, %v450
    %v480 = vsel %vm333, %v458, %v479
    %v481 = vsel %vm335, %v462, %v480
    %v482 = vsel %vm337, %v466, %v481
    %v483 = vsel %vm339, %v470, %v482
    %v484 = vsel %vm341, %v474, %v483
    %v485 = vsel %vm343, %v478, %v484
    %v487 = vsel %vm346, %v485, 0.0
    %488 = vadd.xlane.f32.xlu0 %v487
    %v489 = vpop.xlane.xlu0 %488
    %v490 = vrcp.pop %v489
    %v491 = vmul.f32 1.0, %v490
    %v493 = vlaneseq
    %v494 = vshrl.u32 %v493, 7
    %v495 = vsub.s32 0, %v494
    %v496 = vrot.slane %v491, %v495
    %v497 = vlaneseq
    %v498 = vshrl.u32 %v497, 7
    %v499 = vsub.s32 1, %v498
    %v500 = vrot.slane %v491, %v499
    %v501 = vlaneseq
    %v502 = vshrl.u32 %v501, 7
    %v503 = vsub.s32 2, %v502
    %v504 = vrot.slane %v491, %v503
    %v505 = vlaneseq
    %v506 = vshrl.u32 %v505, 7
    %v507 = vsub.s32 3, %v506
    %v508 = vrot.slane %v491, %v507
    %v509 = vlaneseq
    %v510 = vshrl.u32 %v509, 7
    %v511 = vsub.s32 4, %v510
    %v512 = vrot.slane %v491, %v511
    %v513 = vlaneseq
    %v514 = vshrl.u32 %v513, 7
    %v515 = vsub.s32 5, %v514
    %v516 = vrot.slane %v491, %v515
    %v517 = vlaneseq
    %v518 = vshrl.u32 %v517, 7
    %v519 = vsub.s32 6, %v518
    %v520 = vrot.slane %v491, %v519
    %v521 = vlaneseq
    %v522 = vshrl.u32 %v521, 7
    %v523 = vsub.s32 7, %v522
    %v524 = vrot.slane %v491, %v523
    %v533 = vmul.f32 %v400, %v496
    %v534 = vmul.f32 %v402, %v500
    %v535 = vmul.f32 %v404, %v504
    %v536 = vmul.f32 %v406, %v508
    %v537 = vmul.f32 %v408, %v512
    %v538 = vmul.f32 %v410, %v516
    %v539 = vmul.f32 %v412, %v520
    %v540 = vmul.f32 %v414, %v524
    %549 = vset.pattern.permute.xlu0 0
    %550 = vperm.xlu0 %549, %v533
    %v551 = vpop.permute.xlu0 %550
    %552 = vset.pattern.permute.xlu0 0
    %553 = vperm.xlu0 %552, %v534
    %v554 = vpop.permute.xlu0 %553
    %555 = vset.pattern.permute.xlu0 0
    %556 = vperm.xlu0 %555, %v535
    %v557 = vpop.permute.xlu0 %556
    %558 = vset.pattern.permute.xlu0 0
    %559 = vperm.xlu0 %558, %v536
    %v560 = vpop.permute.xlu0 %559
    %561 = vset.pattern.permute.xlu0 0
    %562 = vperm.xlu0 %561, %v537
    %v563 = vpop.permute.xlu0 %562
    %564 = vset.pattern.permute.xlu0 0
    %565 = vperm.xlu0 %564, %v538
    %v566 = vpop.permute.xlu0 %565
    %567 = vset.pattern.permute.xlu0 0
    %568 = vperm.xlu0 %567, %v539
    %v569 = vpop.permute.xlu0 %568
    %570 = vset.pattern.permute.xlu0 0
    %571 = vperm.xlu0 %570, %v540
    %v572 = vpop.permute.xlu0 %571
    %v573 = vlaneseq
    %v574 = vshrl.u32 %v573, 7
    %v575 = vsub.s32 %v298, %v574
    %v576 = vrot.slane %v551, %v575
    %v577 = vlaneseq
    %v578 = vshrl.u32 %v577, 7
    %v579 = vsub.s32 %v298, %v578
    %v580 = vrot.slane %v554, %v579
    %v581 = vlaneseq
    %v582 = vshrl.u32 %v581, 7
    %v583 = vsub.s32 %v298, %v582
    %v584 = vrot.slane %v557, %v583
    %v585 = vlaneseq
    %v586 = vshrl.u32 %v585, 7
    %v587 = vsub.s32 %v298, %v586
    %v588 = vrot.slane %v560, %v587
    %v589 = vlaneseq
    %v590 = vshrl.u32 %v589, 7
    %v591 = vsub.s32 %v298, %v590
    %v592 = vrot.slane %v563, %v591
    %v593 = vlaneseq
    %v594 = vshrl.u32 %v593, 7
    %v595 = vsub.s32 %v298, %v594
    %v596 = vrot.slane %v566, %v595
    %v597 = vlaneseq
    %v598 = vshrl.u32 %v597, 7
    %v599 = vsub.s32 %v298, %v598
    %v600 = vrot.slane %v569, %v599
    %v601 = vlaneseq
    %v602 = vshrl.u32 %v601, 7
    %v603 = vsub.s32 %v298, %v602
    %v604 = vrot.slane %v572, %v603
    %v605 = vsel %vm331, %v580, %v576
    %v606 = vsel %vm333, %v584, %v605
    %v607 = vsel %vm335, %v588, %v606
    %v608 = vsel %vm337, %v592, %v607
    %v609 = vsel %vm339, %v596, %v608
    %v610 = vsel %vm341, %v600, %v609
    %v611 = vsel %vm343, %v604, %v610
    %613 = vst.msk [vmem:[#allocation9] sm:$0xff] %vm346, %v611
    %v622 = vmul.f32 %v54, %v425
    %v623 = vmul.f32 %v55, %v428
    %v624 = vmul.f32 %v56, %v431
    %v625 = vmul.f32 %v57, %v434
    %v626 = vmul.f32 %v58, %v437
    %v627 = vmul.f32 %v59, %v440
    %v628 = vmul.f32 %v60, %v443
    %v629 = vmul.f32 %v61, %v446
    %v630 = vsel %vm73, %v622, 0.0
    %v631 = vrot.slane %v630, 4
    %v632 = vadd.f32 %v630, %v631
    %v633 = vrot.slane %v632, 2
    %v634 = vadd.f32 %v632, %v633
    %v635 = vrot.slane %v634, 1
    %v636 = vadd.f32 %v634, %v635
    %v637 = vsel %vm73, %v623, 0.0
    %v638 = vrot.slane %v637, 4
    %v639 = vadd.f32 %v637, %v638
    %v640 = vrot.slane %v639, 2
    %v641 = vadd.f32 %v639, %v640
    %v642 = vrot.slane %v641, 1
    %v643 = vadd.f32 %v641, %v642
    %v644 = vsel %vm73, %v624, 0.0
    %v645 = vrot.slane %v644, 4
    %v646 = vadd.f32 %v644, %v645
    %v647 = vrot.slane %v646, 2
    %v648 = vadd.f32 %v646, %v647
    %v649 = vrot.slane %v648, 1
    %v650 = vadd.f32 %v648, %v649
    %v651 = vsel %vm73, %v625, 0.0
    %v652 = vrot.slane %v651, 4
    %v653 = vadd.f32 %v651, %v652
    %v654 = vrot.slane %v653, 2
    %v655 = vadd.f32 %v653, %v654
    %v656 = vrot.slane %v655, 1
    %v657 = vadd.f32 %v655, %v656
    %v658 = vsel %vm73, %v626, 0.0
    %v659 = vrot.slane %v658, 4
    %v660 = vadd.f32 %v658, %v659
    %v661 = vrot.slane %v660, 2
    %v662 = vadd.f32 %v660, %v661
    %v663 = vrot.slane %v662, 1
    %v664 = vadd.f32 %v662, %v663
    %v665 = vsel %vm73, %v627, 0.0
    %v666 = vrot.slane %v665, 4
    %v667 = vadd.f32 %v665, %v666
    %v668 = vrot.slane %v667, 2
    %v669 = vadd.f32 %v667, %v668
    %v670 = vrot.slane %v669, 1
    %v671 = vadd.f32 %v669, %v670
    %v672 = vsel %vm73, %v628, 0.0
    %v673 = vrot.slane %v672, 4
    %v674 = vadd.f32 %v672, %v673
    %v675 = vrot.slane %v674, 2
    %v676 = vadd.f32 %v674, %v675
    %v677 = vrot.slane %v676, 1
    %v678 = vadd.f32 %v676, %v677
    %v679 = vsel %vm73, %v629, 0.0
    %v680 = vrot.slane %v679, 4
    %v681 = vadd.f32 %v679, %v680
    %v682 = vrot.slane %v681, 2
    %v683 = vadd.f32 %v681, %v682
    %v684 = vrot.slane %v683, 1
    %v685 = vadd.f32 %v683, %v684
    %v686 = vrot.slane %v491, 1
    %v687 = vrot.slane %v491, 2
    %v688 = vrot.slane %v491, 3
    %v689 = vrot.slane %v491, 4
    %v690 = vrot.slane %v491, 5
    %v691 = vrot.slane %v491, 6
    %v692 = vrot.slane %v491, 7
    %v701 = vmul.f32 %v636, %v491
    %v702 = vmul.f32 %v643, %v686
    %v703 = vmul.f32 %v650, %v687
    %v704 = vmul.f32 %v657, %v688
    %v705 = vmul.f32 %v664, %v689
    %v706 = vmul.f32 %v671, %v690
    %v707 = vmul.f32 %v678, %v691
    %v708 = vmul.f32 %v685, %v692
    %v717 = vrot.slane %v702, 7
    %v718 = vsel %vm331, %v717, %v701
    %v719 = vrot.slane %v703, 6
    %v720 = vsel %vm333, %v719, %v718
    %v721 = vrot.slane %v704, 5
    %v722 = vsel %vm335, %v721, %v720
    %v723 = vrot.slane %v705, 4
    %v724 = vsel %vm337, %v723, %v722
    %v725 = vrot.slane %v706, 3
    %v726 = vsel %vm339, %v725, %v724
    %v727 = vrot.slane %v707, 2
    %v728 = vsel %vm341, %v727, %v726
    %v729 = vrot.slane %v708, 1
    %v730 = vsel %vm343, %v729, %v728
    %732 = vst.msk [vmem:[#allocation8] sm:$0xff] %vm73, %v730
    // Predicated region
    $region30: #{tpu_custom_call.1} parent=1 // pred_check
      _
    $region31: #{tpu_custom_call.1} parent=1 // pred_check_branch
      %734 = sbr.rel (0) target = $region33
    $region32: #{tpu_custom_call.1} parent=1 // pred_region
      %s736 = ssub.s32 128, 128
      %737 = vsyncadd [#allocation5], %s736
      %s739 = sshll.u32 [#allocation8], 4
      %s740 = int_to_ptr.vmem [resolvable:$true] %s739
      %742 = dma.vmem_to_hbm [thread:$0]  %s740, 128, %s5, [#allocation5]
    $region33: #{tpu_custom_call.1} parent=1 // pred_fallthru
      _
    // Predicated region
    $region34: #{tpu_custom_call.1} parent=1 // pred_check
      _
    $region35: #{tpu_custom_call.1} parent=1 // pred_check_branch
      %744 = sbr.rel (0) target = $region37
    $region36: #{tpu_custom_call.1} parent=1 // pred_region
      %s746 = ssub.s32 128, 128
      %747 = vsyncadd [#allocation10], %s746
      %s749 = sshll.u32 [#allocation9], 4
      %s750 = int_to_ptr.vmem [resolvable:$true] %s749
      %752 = dma.vmem_to_hbm [thread:$0]  %s750, 128, %s6, [#allocation10]
    $region37: #{tpu_custom_call.1} parent=1 // pred_fallthru
      _
    // Predicated region
    $region38: #{tpu_custom_call.1} parent=1 // pred_check
      _
    $region39: #{tpu_custom_call.1} parent=1 // pred_check_branch
      %754 = sbr.rel (0) target = $region41
    $region40: #{tpu_custom_call.1} parent=1 // pred_region
      %755 = dma.done [#allocation5], 128
    $region41: #{tpu_custom_call.1} parent=1 // pred_fallthru
      _
    // Predicated region
    $region42: #{tpu_custom_call.1} parent=1 // pred_check
      _
    $region43: #{tpu_custom_call.1} parent=1 // pred_check_branch
      %757 = sbr.rel (0) target = $region45
    $region44: #{tpu_custom_call.1} parent=1 // pred_region
      %758 = dma.done [#allocation10], 128
    $region45: #{tpu_custom_call.1} parent=1 // pred_fallthru
      _
    %759 = vsyncpa [#allocation4], 1
    %760 = vsyncpa [#allocation7], 1
    %761 = vsyncpa [#allocation5], 1
    %762 = vsyncpa [#allocation10], 1

// kernel: tpu_custom_call.1
$region0: #{tpu_custom_call.1}
  #allocation0 [shape = 'u32[]', space=smem, size = 0x4, offset = 0x4, fixed_abs, tag = 'smem constant byte address 0x4 - core index']
  #allocation1 [shape = 'u32[144,128]{1,0:T(1,128)}', space=vmem, size = 0x12000, scoped, tag = 'internal scratch']
  #allocation2 [shape = 'f32[1,1]{1,0:T(1,128)S(1)}', space=vmem, size = 0x200, scoped, tag = 'scoped memory for tpu_custom_call.1']
  %s0 = inlined_call_operand.hbm [shape: f32[8,8,32], index: 0, kind: input, shape index: {}]
  %s1 = inlined_call_operand.hbm [shape: f32[32,32], index: 1, kind: input, shape index: {}]
  %s2 = inlined_call_operand.vmem [shape: f32[1,32], index: 2, kind: input, shape index: {}]
  %s3 = inlined_call_operand.vmem [shape: f32[1,32], index: 3, kind: input, shape index: {}]
  %s4 = inlined_call_operand.<no memory space> [shape: f32[1,1], index: 4, kind: input, shape index: {}]
  %s5 = inlined_call_operand.hbm [shape: f32[8,32], index: 5, kind: output, shape index: {0}]
  %s6 = inlined_call_operand.hbm [shape: f32[8,8], index: 6, kind: output, shape index: {1}]
  %7 = xla_tuple %s5, %s6
  %s8 = sld [smem:[#allocation0]]
  $region46: #{tpu_custom_call.1} parent=0
    _
  %s10 = ssub.s32 1, %s8
  %s11 = scalar_select 0, %s10, %s8
  %v12 = vstv %s4
  %13 = vst [vmem:[#allocation2] sm:$0x1] %v12
  $region1: #{tpu_custom_call.1} parent=0
    #allocation3 [shape = 'u8[32768]{0}', space=vmem, size = 0x8000, scoped, tag = 'input window, operand 0, single buffered']
    #allocation4 [shape = 's32[1]{0}', space=sflag, size = 0x4, scoped, tag = 'scoped memory for tpu_custom_call.1']
    #allocation5 [shape = 's32[1]{0}', space=sflag, size = 0x4, scoped, tag = 'scoped memory for tpu_custom_call.1']
    #allocation6 [shape = 'u8[16384]{0}', space=vmem, size = 0x4000, scoped, tag = 'input window, operand 1, single buffered']
    #allocation7 [shape = 's32[1]{0}', space=sflag, size = 0x4, scoped, tag = 'scoped memory for tpu_custom_call.1']
    #allocation8 [shape = 'u8[4096]{0}', space=vmem, size = 0x1000, scoped, tag = 'output window, operand 0, single buffered']
    #allocation9 [shape = 'u8[4096]{0}', space=vmem, size = 0x1000, scoped, tag = 'output window, operand 1, single buffered']
    #allocation10 [shape = 's32[1]{0}', space=sflag, size = 0x4, scoped, tag = 'scoped memory for tpu_custom_call.1']
    %14 = vsyncpa [#allocation4], 0
    %15 = vsyncpa [#allocation7], 0
    %16 = vsyncpa [#allocation5], 0
    %17 = vsyncpa [#allocation10], 0
    // Predicated region
    $region2: #{tpu_custom_call.1} parent=1 // pred_check
      _
    $region3: #{tpu_custom_call.1} parent=1 // pred_check_branch
      %19 = sbr.rel (0) target = $region5
    $region4: #{tpu_custom_call.1} parent=1 // pred_region
      %s21 = ssub.s32 1024, 1024
      %22 = vsyncadd [#allocation4], %s21
      %s23 = sshll.u32 [#allocation3], 4
      %s24 = int_to_ptr.vmem [resolvable:$true] %s23
      %29 = dma.hbm_to_vmem [thread:$0]  %s0, 1024, %s24, [#allocation4], 128, 128, 8
    $region5: #{tpu_custom_call.1} parent=1 // pred_fallthru
      _
    // Predicated region
    $region6: #{tpu_custom_call.1} parent=1 // pred_check
      _
    $region7: #{tpu_custom_call.1} parent=1 // pred_check_branch
      %31 = sbr.rel (0) target = $region9
    $region8: #{tpu_custom_call.1} parent=1 // pred_region
      %s33 = ssub.s32 512, 512
      %34 = vsyncadd [#allocation7], %s33
      %s35 = sshll.u32 [#allocation6], 4
      %s36 = int_to_ptr.vmem [resolvable:$true] %s35
      %41 = dma.hbm_to_vmem [thread:$0]  %s1, 512, %s36, [#allocation7], 128, 128, 8
    $region9: #{tpu_custom_call.1} parent=1 // pred_fallthru
      _
    // Predicated region
    $region10: #{tpu_custom_call.1} parent=1 // pred_check
      _
    $region11: #{tpu_custom_call.1} parent=1 // pred_check_branch
      %43 = sbr.rel (0) target = $region13
    $region12: #{tpu_custom_call.1} parent=1 // pred_region
      _
    $region13: #{tpu_custom_call.1} parent=1 // pred_fallthru
      _
    // Predicated region
    $region14: #{tpu_custom_call.1} parent=1 // pred_check
      _
    $region15: #{tpu_custom_call.1} parent=1 // pred_check_branch
      %45 = sbr.rel (0) target = $region17
    $region16: #{tpu_custom_call.1} parent=1 // pred_region
      _
    $region17: #{tpu_custom_call.1} parent=1 // pred_fallthru
      _
    // Predicated region
    $region18: #{tpu_custom_call.1} parent=1 // pred_check
      _
    $region19: #{tpu_custom_call.1} parent=1 // pred_check_branch
      %47 = sbr.rel (0) target = $region21
    $region20: #{tpu_custom_call.1} parent=1 // pred_region
      _
    $region21: #{tpu_custom_call.1} parent=1 // pred_fallthru
      _
    // Predicated region
    $region22: #{tpu_custom_call.1} parent=1 // pred_check
      _
    $region23: #{tpu_custom_call.1} parent=1 // pred_check_branch
      %49 = sbr.rel (0) target = $region25
    $region24: #{tpu_custom_call.1} parent=1 // pred_region
      %50 = dma.done [#allocation4], 1024
    $region25: #{tpu_custom_call.1} parent=1 // pred_fallthru
      _
    // Predicated region
    $region26: #{tpu_custom_call.1} parent=1 // pred_check
      _
    $region27: #{tpu_custom_call.1} parent=1 // pred_check_branch
      %52 = sbr.rel (0) target = $region29
    $region28: #{tpu_custom_call.1} parent=1 // pred_region
      %53 = dma.done [#allocation7], 512
    $region29: #{tpu_custom_call.1} parent=1 // pred_fallthru
      _
    %v54 = vld [vmem:[#allocation3] sm:$0xff]
    %v55 = vld [vmem:[#allocation3 + $0x8] sm:$0xff]
    %v56 = vld [vmem:[#allocation3 + $0x10] sm:$0xff]
    %v57 = vld [vmem:[#allocation3 + $0x18] sm:$0xff]
    %v58 = vld [vmem:[#allocation3 + $0x20] sm:$0xff]
    %v59 = vld [vmem:[#allocation3 + $0x28] sm:$0xff]
    %v60 = vld [vmem:[#allocation3 + $0x30] sm:$0xff]
    %v61 = vld [vmem:[#allocation3 + $0x38] sm:$0xff]
    %v62 = vld [vmem:[#allocation6] sm:$0xff]
    %v63 = vld [vmem:[#allocation6 + $0x8] sm:$0xff]
    %v64 = vld [vmem:[#allocation6 + $0x10] sm:$0xff]
    %v65 = vld [vmem:[#allocation6 + $0x18] sm:$0xff]
    %v66 = vld [vmem:[%s2] sm:$0x1]
    %v68 = vlaneseq
    %v69 = vshrl.u32 %v68, 7
    %v70 = vsub.s32 0, %v69
    %v71 = vrot.slane %v66, %v70
    %vm73 = vcmask 261120
    %v75 = vsel %vm73, %v54, 0
    %v78 = vsel %vm73, %v55, 0
    %v81 = vsel %vm73, %v56, 0
    %v84 = vsel %vm73, %v57, 0
    %v87 = vsel %vm73, %v58, 0
    %v90 = vsel %vm73, %v59, 0
    %v93 = vsel %vm73, %v60, 0
    %v96 = vsel %vm73, %v61, 0
    %98 = vmatprep.subr.mxu0 0.0
    %99 = vmatpush1.msra.mxu0 %v62
    %100 = vmatprep.subr.mxu0 0.0
    %101 = vmatpush1.msra.mxu0 %v63
    %102 = vmatprep.subr.mxu0 0.0
    %103 = vmatpush1.msra.mxu0 %v64
    %104 = vmatprep.subr.mxu0 0.0
    %105 = vmatpush1.msra.mxu0 %v65
    %106 = vmatprep.subr.mxu0 0.0
    %107 = vmatpush1.msra.mxu0 0.0
    %108 = vmatprep.subr.mxu0 0.0
    %109 = vmatpush1.msra.mxu0 0.0
    %110 = vmatprep.subr.mxu0 0.0
    %111 = vmatpush1.msra.mxu0 0.0
    %112 = vmatprep.subr.mxu0 0.0
    %113 = vmatpush1.msra.mxu0 0.0
    %114 = vmatprep.subr.mxu0 0.0
    %115 = vmatpush1.msra.mxu0 0.0
    %116 = vmatprep.subr.mxu0 0.0
    %117 = vmatpush1.msra.mxu0 0.0
    %118 = vmatprep.subr.mxu0 0.0
    %119 = vmatpush1.msra.mxu0 0.0
    %120 = vmatprep.subr.mxu0 0.0
    %121 = vmatpush1.msra.mxu0 0.0
    %122 = vmatprep.subr.mxu0 0.0
    %123 = vmatpush1.msra.mxu0 0.0
    %124 = vmatprep.subr.mxu0 0.0
    %125 = vmatpush1.msra.mxu0 0.0
    %126 = vmatprep.subr.mxu0 0.0
    %127 = vmatpush1.msra.mxu0 0.0
    %128 = vmatprep.subr.mxu0 0.0
    %129 = vmatpush1.msra.mxu0 0.0
    %130 = vmatprep.subr.mxu0 0.0
    %131 = vmatpush1.msra.mxu0 0.0
    %132 = vmatprep.subr.mxu0 0.0
    %133 = vmatpush1.msra.mxu0 0.0
    %134 = vmatprep.subr.mxu0 0.0
    %135 = vmatpush1.msra.mxu0 0.0
    %136 = vmatprep.subr.mxu0 0.0
    %137 = vmatpush1.msra.mxu0 0.0
    %138 = vmatprep.subr.mxu0 0.0
    %139 = vmatpush1.msra.mxu0 0.0
    %140 = vmatprep.subr.mxu0 0.0
    %141 = vmatpush1.msra.mxu0 0.0
    %142 = vmatprep.subr.mxu0 0.0
    %143 = vmatpush1.msra.mxu0 0.0
    %144 = vmatprep.subr.mxu0 0.0
    %145 = vmatpush1.msra.mxu0 0.0
    %146 = vmatprep.subr.mxu0 0.0
    %147 = vmatpush1.msra.mxu0 0.0
    %148 = vmatprep.subr.mxu0 0.0
    %149 = vmatpush1.msra.mxu0 0.0
    %150 = vmatprep.subr.mxu0 0.0
    %151 = vmatpush1.msra.mxu0 0.0
    %152 = vmatprep.subr.mxu0 0.0
    %153 = vmatpush1.msra.mxu0 0.0
    %154 = vmatprep.subr.mxu0 0.0
    %155 = vmatpush1.msra.mxu0 0.0
    %156 = vmatprep.subr.mxu0 0.0
    %157 = vmatpush1.msra.mxu0 0.0
    %158 = vmatprep.subr.mxu0 0.0
    %159 = vmatpush1.msra.mxu0 0.0
    %160 = vmatprep.subr.mxu0 0.0
    %161 = vmatpush1.msra.mxu0 0.0
    %162 = vmatprep.mubr.f32.mxu0 0.0
    %163 = vmatmul.mubr.f32.gmra.mrb[0].mxu0 %v75
    %v164 = vpop.f32.mrb[0].mxu0
    %v165 = vadd.f32 %v71, %v164
    %v166 = vpop.f32.mrb[0].mxu0
    %167 = vmatprep.mubr.f32.mxu0 0.0
    %168 = vmatmul.mubr.f32.gmra.mrb[0].mxu0 %v78
    %v169 = vpop.f32.mrb[0].mxu0
    %v170 = vadd.f32 %v71, %v169
    %v171 = vpop.f32.mrb[0].mxu0
    %172 = vmatprep.mubr.f32.mxu0 0.0
    %173 = vmatmul.mubr.f32.gmra.mrb[0].mxu0 %v81
    %v174 = vpop.f32.mrb[0].mxu0
    %v175 = vadd.f32 %v71, %v174
    %v176 = vpop.f32.mrb[0].mxu0
    %177 = vmatprep.mubr.f32.mxu0 0.0
    %178 = vmatmul.mubr.f32.gmra.mrb[0].mxu0 %v84
    %v179 = vpop.f32.mrb[0].mxu0
    %v180 = vadd.f32 %v71, %v179
    %v181 = vpop.f32.mrb[0].mxu0
    %182 = vmatprep.mubr.f32.mxu0 0.0
    %183 = vmatmul.mubr.f32.gmra.mrb[0].mxu0 %v87
    %v184 = vpop.f32.mrb[0].mxu0
    %v185 = vadd.f32 %v71, %v184
    %v186 = vpop.f32.mrb[0].mxu0
    %187 = vmatprep.mubr.f32.mxu0 0.0
    %188 = vmatmul.mubr.f32.gmra.mrb[0].mxu0 %v90
    %v189 = vpop.f32.mrb[0].mxu0
    %v190 = vadd.f32 %v71, %v189
    %v191 = vpop.f32.mrb[0].mxu0
    %192 = vmatprep.mubr.f32.mxu0 0.0
    %193 = vmatmul.mubr.f32.gmra.mrb[0].mxu0 %v93
    %v194 = vpop.f32.mrb[0].mxu0
    %v195 = vadd.f32 %v71, %v194
    %v196 = vpop.f32.mrb[0].mxu0
    %197 = vmatprep.mubr.f32.mxu0 0.0
    %198 = vmatmul.mubr.f32.gmra.mrb[0].mxu0 %v96
    %v199 = vpop.f32.mrb[0].mxu0
    %v200 = vadd.f32 %v71, %v199
    %v201 = vpop.f32.mrb[0].mxu0
    %202 = vdwg.mxu0
    %v203 = vtanh.pop %v165
    %v204 = vtanh.pop %v170
    %v205 = vtanh.pop %v175
    %v206 = vtanh.pop %v180
    %v207 = vtanh.pop %v185
    %v208 = vtanh.pop %v190
    %v209 = vtanh.pop %v195
    %v210 = vtanh.pop %v200
    %v211 = vld [vmem:[%s3] sm:$0x1]
    %v213 = vlaneseq
    %v214 = vshrl.u32 %v213, 7
    %v215 = vsub.s32 0, %v214
    %v216 = vrot.slane %v211, %v215
    %v218 = vmul.f32 %v203, %v216
    %v219 = vmul.f32 %v204, %v216
    %v220 = vmul.f32 %v205, %v216
    %v221 = vmul.f32 %v206, %v216
    %v222 = vmul.f32 %v207, %v216
    %v223 = vmul.f32 %v208, %v216
    %v224 = vmul.f32 %v209, %v216
    %v225 = vmul.f32 %v210, %v216
    %v226 = vsel %vm73, %v218, 0.0
    %227 = vadd.xlane.f32.xlu0 %v226
    %v228 = vpop.xlane.xlu0 %227
    %v229 = vsel %vm73, %v219, 0.0
    %230 = vadd.xlane.f32.xlu0 %v229
    %v231 = vpop.xlane.xlu0 %230
    %v232 = vsel %vm73, %v220, 0.0
    %233 = vadd.xlane.f32.xlu0 %v232
    %v234 = vpop.xlane.xlu0 %233
    %v235 = vsel %vm73, %v221, 0.0
    %236 = vadd.xlane.f32.xlu0 %v235
    %v237 = vpop.xlane.xlu0 %236
    %v238 = vsel %vm73, %v222, 0.0
    %239 = vadd.xlane.f32.xlu0 %v238
    %v240 = vpop.xlane.xlu0 %239
    %v241 = vsel %vm73, %v223, 0.0
    %242 = vadd.xlane.f32.xlu0 %v241
    %v243 = vpop.xlane.xlu0 %242
    %v244 = vsel %vm73, %v224, 0.0
    %245 = vadd.xlane.f32.xlu0 %v244
    %v246 = vpop.xlane.xlu0 %245
    %v247 = vsel %vm73, %v225, 0.0
    %248 = vadd.xlane.f32.xlu0 %v247
    %v249 = vpop.xlane.xlu0 %248
    %v250 = vld [vmem:[#allocation2] sm:$0x1]
    %v252 = vlaneseq
    %v253 = vshrl.u32 %v252, 7
    %v254 = vsub.s32 0, %v253
    %v255 = vrot.slane %v250, %v254
    %v257 = vadd.f32 %v228, %v255
    %v258 = vadd.f32 %v231, %v255
    %v259 = vadd.f32 %v234, %v255
    %v260 = vadd.f32 %v237, %v255
    %v261 = vadd.f32 %v240, %v255
    %v262 = vadd.f32 %v243, %v255
    %v263 = vadd.f32 %v246, %v255
    %v264 = vadd.f32 %v249, %v255
    %273 = vset.pattern.permute.xlu0 0
    %274 = vperm.xlu0 %273, %v257
    %v275 = vpop.permute.xlu0 %274
    %276 = vset.pattern.permute.xlu0 0
    %277 = vperm.xlu0 %276, %v258
    %v278 = vpop.permute.xlu0 %277
    %279 = vset.pattern.permute.xlu0 0
    %280 = vperm.xlu0 %279, %v259
    %v281 = vpop.permute.xlu0 %280
    %282 = vset.pattern.permute.xlu0 0
    %283 = vperm.xlu0 %282, %v260
    %v284 = vpop.permute.xlu0 %283
    %285 = vset.pattern.permute.xlu0 0
    %286 = vperm.xlu0 %285, %v261
    %v287 = vpop.permute.xlu0 %286
    %288 = vset.pattern.permute.xlu0 0
    %289 = vperm.xlu0 %288, %v262
    %v290 = vpop.permute.xlu0 %289
    %291 = vset.pattern.permute.xlu0 0
    %292 = vperm.xlu0 %291, %v263
    %v293 = vpop.permute.xlu0 %292
    %294 = vset.pattern.permute.xlu0 0
    %295 = vperm.xlu0 %294, %v264
    %v296 = vpop.permute.xlu0 %295
    %v297 = vlaneseq
    %v298 = vand.u32 %v297, 127
    %v299 = vlaneseq
    %v300 = vshrl.u32 %v299, 7
    %v301 = vsub.s32 %v298, %v300
    %v302 = vrot.slane %v275, %v301
    %v303 = vlaneseq
    %v304 = vshrl.u32 %v303, 7
    %v305 = vsub.s32 %v298, %v304
    %v306 = vrot.slane %v278, %v305
    %v307 = vlaneseq
    %v308 = vshrl.u32 %v307, 7
    %v309 = vsub.s32 %v298, %v308
    %v310 = vrot.slane %v281, %v309
    %v311 = vlaneseq
    %v312 = vshrl.u32 %v311, 7
    %v313 = vsub.s32 %v298, %v312
    %v314 = vrot.slane %v284, %v313
    %v315 = vlaneseq
    %v316 = vshrl.u32 %v315, 7
    %v317 = vsub.s32 %v298, %v316
    %v318 = vrot.slane %v287, %v317
    %v319 = vlaneseq
    %v320 = vshrl.u32 %v319, 7
    %v321 = vsub.s32 %v298, %v320
    %v322 = vrot.slane %v290, %v321
    %v323 = vlaneseq
    %v324 = vshrl.u32 %v323, 7
    %v325 = vsub.s32 %v298, %v324
    %v326 = vrot.slane %v293, %v325
    %v327 = vlaneseq
    %v328 = vshrl.u32 %v327, 7
    %v329 = vsub.s32 %v298, %v328
    %v330 = vrot.slane %v296, %v329
    %vm331 = vcmask 1041409
    %v332 = vsel %vm331, %v306, %v302
    %vm333 = vcmask 1042434
    %v334 = vsel %vm333, %v310, %v332
    %vm335 = vcmask 1043459
    %v336 = vsel %vm335, %v314, %v334
    %vm337 = vcmask 1044484
    %v338 = vsel %vm337, %v318, %v336
    %vm339 = vcmask 1045509
    %v340 = vsel %vm339, %v322, %v338
    %vm341 = vcmask 1046534
    %v342 = vsel %vm341, %v326, %v340
    %vm343 = vcmask 1047559
    %v344 = vsel %vm343, %v330, %v342
    %vm346 = vcmask 64512
    %v347 = vsel %vm346, %v344, -inf
    %348 = vmax.xlane.f32.xlu0 %v347
    %v349 = vpop.xlane.xlu0 %348
    %v351 = vlaneseq
    %v352 = vshrl.u32 %v351, 7
    %v353 = vsub.s32 0, %v352
    %v354 = vrot.slane %v349, %v353
    %v355 = vlaneseq
    %v356 = vshrl.u32 %v355, 7
    %v357 = vsub.s32 1, %v356
    %v358 = vrot.slane %v349, %v357
    %v359 = vlaneseq
    %v360 = vshrl.u32 %v359, 7
    %v361 = vsub.s32 2, %v360
    %v362 = vrot.slane %v349, %v361
    %v363 = vlaneseq
    %v364 = vshrl.u32 %v363, 7
    %v365 = vsub.s32 3, %v364
    %v366 = vrot.slane %v349, %v365
    %v367 = vlaneseq
    %v368 = vshrl.u32 %v367, 7
    %v369 = vsub.s32 4, %v368
    %v370 = vrot.slane %v349, %v369
    %v371 = vlaneseq
    %v372 = vshrl.u32 %v371, 7
    %v373 = vsub.s32 5, %v372
    %v374 = vrot.slane %v349, %v373
    %v375 = vlaneseq
    %v376 = vshrl.u32 %v375, 7
    %v377 = vsub.s32 6, %v376
    %v378 = vrot.slane %v349, %v377
    %v379 = vlaneseq
    %v380 = vshrl.u32 %v379, 7
    %v381 = vsub.s32 7, %v380
    %v382 = vrot.slane %v349, %v381
    %v391 = vsub.f32 %v257, %v354
    %v392 = vsub.f32 %v258, %v358
    %v393 = vsub.f32 %v259, %v362
    %v394 = vsub.f32 %v260, %v366
    %v395 = vsub.f32 %v261, %v370
    %v396 = vsub.f32 %v262, %v374
    %v397 = vsub.f32 %v263, %v378
    %v398 = vsub.f32 %v264, %v382
    %v399 = vmul.f32 %v391, 1.442695
    %v400 = vpow.pop %v399
    %v401 = vmul.f32 %v392, 1.442695
    %v402 = vpow.pop %v401
    %v403 = vmul.f32 %v393, 1.442695
    %v404 = vpow.pop %v403
    %v405 = vmul.f32 %v394, 1.442695
    %v406 = vpow.pop %v405
    %v407 = vmul.f32 %v395, 1.442695
    %v408 = vpow.pop %v407
    %v409 = vmul.f32 %v396, 1.442695
    %v410 = vpow.pop %v409
    %v411 = vmul.f32 %v397, 1.442695
    %v412 = vpow.pop %v411
    %v413 = vmul.f32 %v398, 1.442695
    %v414 = vpow.pop %v413
    %423 = vset.pattern.permute.xlu0 0
    %424 = vperm.xlu0 %423, %v400
    %v425 = vpop.permute.xlu0 %424
    %426 = vset.pattern.permute.xlu0 0
    %427 = vperm.xlu0 %426, %v402
    %v428 = vpop.permute.xlu0 %427
    %429 = vset.pattern.permute.xlu0 0
    %430 = vperm.xlu0 %429, %v404
    %v431 = vpop.permute.xlu0 %430
    %432 = vset.pattern.permute.xlu0 0
    %433 = vperm.xlu0 %432, %v406
    %v434 = vpop.permute.xlu0 %433
    %435 = vset.pattern.permute.xlu0 0
    %436 = vperm.xlu0 %435, %v408
    %v437 = vpop.permute.xlu0 %436
    %438 = vset.pattern.permute.xlu0 0
    %439 = vperm.xlu0 %438, %v410
    %v440 = vpop.permute.xlu0 %439
    %441 = vset.pattern.permute.xlu0 0
    %442 = vperm.xlu0 %441, %v412
    %v443 = vpop.permute.xlu0 %442
    %444 = vset.pattern.permute.xlu0 0
    %445 = vperm.xlu0 %444, %v414
    %v446 = vpop.permute.xlu0 %445
    %v447 = vlaneseq
    %v448 = vshrl.u32 %v447, 7
    %v449 = vsub.s32 %v298, %v448
    %v450 = vrot.slane %v425, %v449
    %v451 = vlaneseq
    %v452 = vshrl.u32 %v451, 7
    %v453 = vsub.s32 %v298, %v452
    %v454 = vrot.slane %v428, %v453
    %v455 = vlaneseq
    %v456 = vshrl.u32 %v455, 7
    %v457 = vsub.s32 %v298, %v456
    %v458 = vrot.slane %v431, %v457
    %v459 = vlaneseq
    %v460 = vshrl.u32 %v459, 7
    %v461 = vsub.s32 %v298, %v460
    %v462 = vrot.slane %v434, %v461
    %v463 = vlaneseq
    %v464 = vshrl.u32 %v463, 7
    %v465 = vsub.s32 %v298, %v464
    %v466 = vrot.slane %v437, %v465
    %v467 = vlaneseq
    %v468 = vshrl.u32 %v467, 7
    %v469 = vsub.s32 %v298, %v468
    %v470 = vrot.slane %v440, %v469
    %v471 = vlaneseq
    %v472 = vshrl.u32 %v471, 7
    %v473 = vsub.s32 %v298, %v472
    %v474 = vrot.slane %v443, %v473
    %v475 = vlaneseq
    %v476 = vshrl.u32 %v475, 7
    %v477 = vsub.s32 %v298, %v476
    %v478 = vrot.slane %v446, %v477
    %v479 = vsel %vm331, %v454, %v450
    %v480 = vsel %vm333, %v458, %v479
    %v481 = vsel %vm335, %v462, %v480
    %v482 = vsel %vm337, %v466, %v481
    %v483 = vsel %vm339, %v470, %v482
    %v484 = vsel %vm341, %v474, %v483
    %v485 = vsel %vm343, %v478, %v484
    %v487 = vsel %vm346, %v485, 0.0
    %488 = vadd.xlane.f32.xlu0 %v487
    %v489 = vpop.xlane.xlu0 %488
    %v490 = vrcp.pop %v489
    %v491 = vmul.f32 1.0, %v490
    %v493 = vlaneseq
    %v494 = vshrl.u32 %v493, 7
    %v495 = vsub.s32 0, %v494
    %v496 = vrot.slane %v491, %v495
    %v497 = vlaneseq
    %v498 = vshrl.u32 %v497, 7
    %v499 = vsub.s32 1, %v498
    %v500 = vrot.slane %v491, %v499
    %v501 = vlaneseq
    %v502 = vshrl.u32 %v501, 7
    %v503 = vsub.s32 2, %v502
    %v504 = vrot.slane %v491, %v503
    %v505 = vlaneseq
    %v506 = vshrl.u32 %v505, 7
    %v507 = vsub.s32 3, %v506
    %v508 = vrot.slane %v491, %v507
    %v509 = vlaneseq
    %v510 = vshrl.u32 %v509, 7
    %v511 = vsub.s32 4, %v510
    %v512 = vrot.slane %v491, %v511
    %v513 = vlaneseq
    %v514 = vshrl.u32 %v513, 7
    %v515 = vsub.s32 5, %v514
    %v516 = vrot.slane %v491, %v515
    %v517 = vlaneseq
    %v518 = vshrl.u32 %v517, 7
    %v519 = vsub.s32 6, %v518
    %v520 = vrot.slane %v491, %v519
    %v521 = vlaneseq
    %v522 = vshrl.u32 %v521, 7
    %v523 = vsub.s32 7, %v522
    %v524 = vrot.slane %v491, %v523
    %v533 = vmul.f32 %v400, %v496
    %v534 = vmul.f32 %v402, %v500
    %v535 = vmul.f32 %v404, %v504
    %v536 = vmul.f32 %v406, %v508
    %v537 = vmul.f32 %v408, %v512
    %v538 = vmul.f32 %v410, %v516
    %v539 = vmul.f32 %v412, %v520
    %v540 = vmul.f32 %v414, %v524
    %549 = vset.pattern.permute.xlu0 0
    %550 = vperm.xlu0 %549, %v533
    %v551 = vpop.permute.xlu0 %550
    %552 = vset.pattern.permute.xlu0 0
    %553 = vperm.xlu0 %552, %v534
    %v554 = vpop.permute.xlu0 %553
    %555 = vset.pattern.permute.xlu0 0
    %556 = vperm.xlu0 %555, %v535
    %v557 = vpop.permute.xlu0 %556
    %558 = vset.pattern.permute.xlu0 0
    %559 = vperm.xlu0 %558, %v536
    %v560 = vpop.permute.xlu0 %559
    %561 = vset.pattern.permute.xlu0 0
    %562 = vperm.xlu0 %561, %v537
    %v563 = vpop.permute.xlu0 %562
    %564 = vset.pattern.permute.xlu0 0
    %565 = vperm.xlu0 %564, %v538
    %v566 = vpop.permute.xlu0 %565
    %567 = vset.pattern.permute.xlu0 0
    %568 = vperm.xlu0 %567, %v539
    %v569 = vpop.permute.xlu0 %568
    %570 = vset.pattern.permute.xlu0 0
    %571 = vperm.xlu0 %570, %v540
    %v572 = vpop.permute.xlu0 %571
    %v573 = vlaneseq
    %v574 = vshrl.u32 %v573, 7
    %v575 = vsub.s32 %v298, %v574
    %v576 = vrot.slane %v551, %v575
    %v577 = vlaneseq
    %v578 = vshrl.u32 %v577, 7
    %v579 = vsub.s32 %v298, %v578
    %v580 = vrot.slane %v554, %v579
    %v581 = vlaneseq
    %v582 = vshrl.u32 %v581, 7
    %v583 = vsub.s32 %v298, %v582
    %v584 = vrot.slane %v557, %v583
    %v585 = vlaneseq
    %v586 = vshrl.u32 %v585, 7
    %v587 = vsub.s32 %v298, %v586
    %v588 = vrot.slane %v560, %v587
    %v589 = vlaneseq
    %v590 = vshrl.u32 %v589, 7
    %v591 = vsub.s32 %v298, %v590
    %v592 = vrot.slane %v563, %v591
    %v593 = vlaneseq
    %v594 = vshrl.u32 %v593, 7
    %v595 = vsub.s32 %v298, %v594
    %v596 = vrot.slane %v566, %v595
    %v597 = vlaneseq
    %v598 = vshrl.u32 %v597, 7
    %v599 = vsub.s32 %v298, %v598
    %v600 = vrot.slane %v569, %v599
    %v601 = vlaneseq
    %v602 = vshrl.u32 %v601, 7
    %v603 = vsub.s32 %v298, %v602
    %v604 = vrot.slane %v572, %v603
    %v605 = vsel %vm331, %v580, %v576
    %v606 = vsel %vm333, %v584, %v605
    %v607 = vsel %vm335, %v588, %v606
    %v608 = vsel %vm337, %v592, %v607
    %v609 = vsel %vm339, %v596, %v608
    %v610 = vsel %vm341, %v600, %v609
    %v611 = vsel %vm343, %v604, %v610
    %613 = vst.msk [vmem:[#allocation9] sm:$0xff] %vm346, %v611
    %v622 = vmul.f32 %v54, %v425
    %v623 = vmul.f32 %v55, %v428
    %v624 = vmul.f32 %v56, %v431
    %v625 = vmul.f32 %v57, %v434
    %v626 = vmul.f32 %v58, %v437
    %v627 = vmul.f32 %v59, %v440
    %v628 = vmul.f32 %v60, %v443
    %v629 = vmul.f32 %v61, %v446
    %v630 = vsel %vm73, %v622, 0.0
    %v631 = vrot.slane %v630, 4
    %v632 = vadd.f32 %v630, %v631
    %v633 = vrot.slane %v632, 2
    %v634 = vadd.f32 %v632, %v633
    %v635 = vrot.slane %v634, 1
    %v636 = vadd.f32 %v634, %v635
    %v637 = vsel %vm73, %v623, 0.0
    %v638 = vrot.slane %v637, 4
    %v639 = vadd.f32 %v637, %v638
    %v640 = vrot.slane %v639, 2
    %v641 = vadd.f32 %v639, %v640
    %v642 = vrot.slane %v641, 1
    %v643 = vadd.f32 %v641, %v642
    %v644 = vsel %vm73, %v624, 0.0
    %v645 = vrot.slane %v644, 4
    %v646 = vadd.f32 %v644, %v645
    %v647 = vrot.slane %v646, 2
    %v648 = vadd.f32 %v646, %v647
    %v649 = vrot.slane %v648, 1
    %v650 = vadd.f32 %v648, %v649
    %v651 = vsel %vm73, %v625, 0.0
    %v652 = vrot.slane %v651, 4
    %v653 = vadd.f32 %v651, %v652
    %v654 = vrot.slane %v653, 2
    %v655 = vadd.f32 %v653, %v654
    %v656 = vrot.slane %v655, 1
    %v657 = vadd.f32 %v655, %v656
    %v658 = vsel %vm73, %v626, 0.0
    %v659 = vrot.slane %v658, 4
    %v660 = vadd.f32 %v658, %v659
    %v661 = vrot.slane %v660, 2
    %v662 = vadd.f32 %v660, %v661
    %v663 = vrot.slane %v662, 1
    %v664 = vadd.f32 %v662, %v663
    %v665 = vsel %vm73, %v627, 0.0
    %v666 = vrot.slane %v665, 4
    %v667 = vadd.f32 %v665, %v666
    %v668 = vrot.slane %v667, 2
    %v669 = vadd.f32 %v667, %v668
    %v670 = vrot.slane %v669, 1
    %v671 = vadd.f32 %v669, %v670
    %v672 = vsel %vm73, %v628, 0.0
    %v673 = vrot.slane %v672, 4
    %v674 = vadd.f32 %v672, %v673
    %v675 = vrot.slane %v674, 2
    %v676 = vadd.f32 %v674, %v675
    %v677 = vrot.slane %v676, 1
    %v678 = vadd.f32 %v676, %v677
    %v679 = vsel %vm73, %v629, 0.0
    %v680 = vrot.slane %v679, 4
    %v681 = vadd.f32 %v679, %v680
    %v682 = vrot.slane %v681, 2
    %v683 = vadd.f32 %v681, %v682
    %v684 = vrot.slane %v683, 1
    %v685 = vadd.f32 %v683, %v684
    %v686 = vrot.slane %v491, 1
    %v687 = vrot.slane %v491, 2
    %v688 = vrot.slane %v491, 3
    %v689 = vrot.slane %v491, 4
    %v690 = vrot.slane %v491, 5
    %v691 = vrot.slane %v491, 6
    %v692 = vrot.slane %v491, 7
    %v701 = vmul.f32 %v636, %v491
    %v702 = vmul.f32 %v643, %v686
    %v703 = vmul.f32 %v650, %v687
    %v704 = vmul.f32 %v657, %v688
    %v705 = vmul.f32 %v664, %v689
    %v706 = vmul.f32 %v671, %v690
    %v707 = vmul.f32 %v678, %v691
    %v708 = vmul.f32 %v685, %v692
    %v717 = vrot.slane %v702, 7
    %v718 = vsel %vm331, %v717, %v701
    %v719 = vrot.slane %v703, 6
    %v720 = vsel %vm333, %v719, %v718
    %v721 = vrot.slane %v704, 5
    %v722 = vsel %vm335, %v721, %v720
    %v723 = vrot.slane %v705, 4
    %v724 = vsel %vm337, %v723, %v722
    %v725 = vrot.slane %v706, 3
    %v726 = vsel %vm339, %v725, %v724
    %v727 = vrot.slane %v707, 2
    %v728 = vsel %vm341, %v727, %v726
    %v729 = vrot.slane %v708, 1
    %v730 = vsel %vm343, %v729, %v728
    %732 = vst.msk [vmem:[#allocation8] sm:$0xff] %vm73, %v730
    // Predicated region
    $region30: #{tpu_custom_call.1} parent=1 // pred_check
      _
    $region31: #{tpu_custom_call.1} parent=1 // pred_check_branch
      %734 = sbr.rel (0) target = $region33
    $region32: #{tpu_custom_call.1} parent=1 // pred_region
      %s736 = ssub.s32 128, 128
      %737 = vsyncadd [#allocation5], %s736
      %s739 = sshll.u32 [#allocation8], 4
      %s740 = int_to_ptr.vmem [resolvable:$true] %s739
      %742 = dma.vmem_to_hbm [thread:$0]  %s740, 128, %s5, [#allocation5]
    $region33: #{tpu_custom_call.1} parent=1 // pred_fallthru
      _
    // Predicated region
    $region34: #{tpu_custom_call.1} parent=1 // pred_check
      _
    $region35: #{tpu_custom_call.1} parent=1 // pred_check_branch
      %744 = sbr.rel (0) target = $region37
    $region36: #{tpu_custom_call.1} parent=1 // pred_region
      %s746 = ssub.s32 128, 128
      %747 = vsyncadd [#allocation10], %s746
      %s749 = sshll.u32 [#allocation9], 4
      %s750 = int_to_ptr.vmem [resolvable:$true] %s749
      %752 = dma.vmem_to_hbm [thread:$0]  %s750, 128, %s6, [#allocation10]
    $region37: #{tpu_custom_call.1} parent=1 // pred_fallthru
      _
    // Predicated region
    $region38: #{tpu_custom_call.1} parent=1 // pred_check
      _
    $region39: #{tpu_custom_call.1} parent=1 // pred_check_branch
      %754 = sbr.rel (0) target = $region41
    $region40: #{tpu_custom_call.1} parent=1 // pred_region
      %755 = dma.done [#allocation5], 128
    $region41: #{tpu_custom_call.1} parent=1 // pred_fallthru
      _
    // Predicated region
    $region42: #{tpu_custom_call.1} parent=1 // pred_check
      _
    $region43: #{tpu_custom_call.1} parent=1 // pred_check_branch
      %757 = sbr.rel (0) target = $region45
    $region44: #{tpu_custom_call.1} parent=1 // pred_region
      %758 = dma.done [#allocation10], 128
    $region45: #{tpu_custom_call.1} parent=1 // pred_fallthru
      _
    %759 = vsyncpa [#allocation4], 1
    %760 = vsyncpa [#allocation7], 1
    %761 = vsyncpa [#allocation5], 1
    %762 = vsyncpa [#allocation10], 1

// kernel: tpu_custom_call.1
$region0: #{tpu_custom_call.1}
  #allocation0 [shape = 'u32[]', space=smem, size = 0x4, offset = 0x4, fixed_abs, tag = 'smem constant byte address 0x4 - core index']
  #allocation1 [shape = 'u32[144,128]{1,0:T(1,128)}', space=vmem, size = 0x12000, scoped, tag = 'internal scratch']
  #allocation2 [shape = 'f32[1,1]{1,0:T(1,128)S(1)}', space=vmem, size = 0x200, scoped, tag = 'scoped memory for tpu_custom_call.1']
  %s0 = inlined_call_operand.hbm [shape: f32[8,8,32], index: 0, kind: input, shape index: {}]
  %s1 = inlined_call_operand.hbm [shape: f32[32,32], index: 1, kind: input, shape index: {}]
  %s2 = inlined_call_operand.vmem [shape: f32[1,32], index: 2, kind: input, shape index: {}]
  %s3 = inlined_call_operand.vmem [shape: f32[1,32], index: 3, kind: input, shape index: {}]
  %s4 = inlined_call_operand.<no memory space> [shape: f32[1,1], index: 4, kind: input, shape index: {}]
  %s5 = inlined_call_operand.hbm [shape: f32[8,32], index: 5, kind: output, shape index: {0}]
  %s6 = inlined_call_operand.hbm [shape: f32[8,8], index: 6, kind: output, shape index: {1}]
  %7 = xla_tuple %s5, %s6
  %s8 = sld [smem:[#allocation0]]
  $region46: #{tpu_custom_call.1} parent=0
    _
  %s10 = ssub.s32 1, %s8
  %s11 = scalar_select 0, %s10, %s8
  %v12 = vstv %s4
  %13 = vst [vmem:[#allocation2] sm:$0x1] %v12
  $region1: #{tpu_custom_call.1} parent=0
    #allocation3 [shape = 'u8[32768]{0}', space=vmem, size = 0x8000, scoped, tag = 'input window, operand 0, single buffered']
    #allocation4 [shape = 's32[1]{0}', space=sflag, size = 0x4, scoped, tag = 'scoped memory for tpu_custom_call.1']
    #allocation5 [shape = 's32[1]{0}', space=sflag, size = 0x4, scoped, tag = 'scoped memory for tpu_custom_call.1']
    #allocation6 [shape = 'u8[16384]{0}', space=vmem, size = 0x4000, scoped, tag = 'input window, operand 1, single buffered']
    #allocation7 [shape = 's32[1]{0}', space=sflag, size = 0x4, scoped, tag = 'scoped memory for tpu_custom_call.1']
    #allocation8 [shape = 'u8[4096]{0}', space=vmem, size = 0x1000, scoped, tag = 'output window, operand 0, single buffered']
    #allocation9 [shape = 'u8[4096]{0}', space=vmem, size = 0x1000, scoped, tag = 'output window, operand 1, single buffered']
    #allocation10 [shape = 's32[1]{0}', space=sflag, size = 0x4, scoped, tag = 'scoped memory for tpu_custom_call.1']
    %14 = vsyncpa [#allocation4], 0
    %15 = vsyncpa [#allocation7], 0
    %16 = vsyncpa [#allocation5], 0
    %17 = vsyncpa [#allocation10], 0
    // Predicated region
    $region2: #{tpu_custom_call.1} parent=1 // pred_check
      _
    $region3: #{tpu_custom_call.1} parent=1 // pred_check_branch
      %19 = sbr.rel (0) target = $region5
    $region4: #{tpu_custom_call.1} parent=1 // pred_region
      %s21 = ssub.s32 1024, 1024
      %22 = vsyncadd [#allocation4], %s21
      %s23 = sshll.u32 [#allocation3], 4
      %s24 = int_to_ptr.vmem [resolvable:$true] %s23
      %29 = dma.hbm_to_vmem [thread:$0]  %s0, 1024, %s24, [#allocation4], 128, 128, 8
    $region5: #{tpu_custom_call.1} parent=1 // pred_fallthru
      _
    // Predicated region
    $region6: #{tpu_custom_call.1} parent=1 // pred_check
      _
    $region7: #{tpu_custom_call.1} parent=1 // pred_check_branch
      %31 = sbr.rel (0) target = $region9
    $region8: #{tpu_custom_call.1} parent=1 // pred_region
      %s33 = ssub.s32 512, 512
      %34 = vsyncadd [#allocation7], %s33
      %s35 = sshll.u32 [#allocation6], 4
      %s36 = int_to_ptr.vmem [resolvable:$true] %s35
      %41 = dma.hbm_to_vmem [thread:$0]  %s1, 512, %s36, [#allocation7], 128, 128, 8
    $region9: #{tpu_custom_call.1} parent=1 // pred_fallthru
      _
    // Predicated region
    $region10: #{tpu_custom_call.1} parent=1 // pred_check
      _
    $region11: #{tpu_custom_call.1} parent=1 // pred_check_branch
      %43 = sbr.rel (0) target = $region13
    $region12: #{tpu_custom_call.1} parent=1 // pred_region
      _
    $region13: #{tpu_custom_call.1} parent=1 // pred_fallthru
      _
    // Predicated region
    $region14: #{tpu_custom_call.1} parent=1 // pred_check
      _
    $region15: #{tpu_custom_call.1} parent=1 // pred_check_branch
      %45 = sbr.rel (0) target = $region17
    $region16: #{tpu_custom_call.1} parent=1 // pred_region
      _
    $region17: #{tpu_custom_call.1} parent=1 // pred_fallthru
      _
    // Predicated region
    $region18: #{tpu_custom_call.1} parent=1 // pred_check
      _
    $region19: #{tpu_custom_call.1} parent=1 // pred_check_branch
      %47 = sbr.rel (0) target = $region21
    $region20: #{tpu_custom_call.1} parent=1 // pred_region
      _
    $region21: #{tpu_custom_call.1} parent=1 // pred_fallthru
      _
    // Predicated region
    $region22: #{tpu_custom_call.1} parent=1 // pred_check
      _
    $region23: #{tpu_custom_call.1} parent=1 // pred_check_branch
      %49 = sbr.rel (0) target = $region25
    $region24: #{tpu_custom_call.1} parent=1 // pred_region
      %50 = dma.done [#allocation4], 1024
    $region25: #{tpu_custom_call.1} parent=1 // pred_fallthru
      _
    // Predicated region
    $region26: #{tpu_custom_call.1} parent=1 // pred_check
      _
    $region27: #{tpu_custom_call.1} parent=1 // pred_check_branch
      %52 = sbr.rel (0) target = $region29
    $region28: #{tpu_custom_call.1} parent=1 // pred_region
      %53 = dma.done [#allocation7], 512
    $region29: #{tpu_custom_call.1} parent=1 // pred_fallthru
      _
    %v54 = vld [vmem:[#allocation3] sm:$0xff]
    %v55 = vld [vmem:[#allocation3 + $0x8] sm:$0xff]
    %v56 = vld [vmem:[#allocation3 + $0x10] sm:$0xff]
    %v57 = vld [vmem:[#allocation3 + $0x18] sm:$0xff]
    %v58 = vld [vmem:[#allocation3 + $0x20] sm:$0xff]
    %v59 = vld [vmem:[#allocation3 + $0x28] sm:$0xff]
    %v60 = vld [vmem:[#allocation3 + $0x30] sm:$0xff]
    %v61 = vld [vmem:[#allocation3 + $0x38] sm:$0xff]
    %v62 = vld [vmem:[#allocation6] sm:$0xff]
    %v63 = vld [vmem:[#allocation6 + $0x8] sm:$0xff]
    %v64 = vld [vmem:[#allocation6 + $0x10] sm:$0xff]
    %v65 = vld [vmem:[#allocation6 + $0x18] sm:$0xff]
    %v66 = vld [vmem:[%s2] sm:$0x1]
    %v68 = vlaneseq
    %v69 = vshrl.u32 %v68, 7
    %v70 = vsub.s32 0, %v69
    %v71 = vrot.slane %v66, %v70
    %vm73 = vcmask 261120
    %v75 = vsel %vm73, %v54, 0
    %v78 = vsel %vm73, %v55, 0
    %v81 = vsel %vm73, %v56, 0
    %v84 = vsel %vm73, %v57, 0
    %v87 = vsel %vm73, %v58, 0
    %v90 = vsel %vm73, %v59, 0
    %v93 = vsel %vm73, %v60, 0
    %v96 = vsel %vm73, %v61, 0
    %98 = vmatprep.subr.mxu0 0.0
    %99 = vmatpush1.msra.mxu0 %v62
    %100 = vmatprep.subr.mxu0 0.0
    %101 = vmatpush1.msra.mxu0 %v63
    %102 = vmatprep.subr.mxu0 0.0
    %103 = vmatpush1.msra.mxu0 %v64
    %104 = vmatprep.subr.mxu0 0.0
    %105 = vmatpush1.msra.mxu0 %v65
    %106 = vmatprep.subr.mxu0 0.0
    %107 = vmatpush1.msra.mxu0 0.0
    %108 = vmatprep.subr.mxu0 0.0
    %109 = vmatpush1.msra.mxu0 0.0
    %110 = vmatprep.subr.mxu0 0.0
    %111 = vmatpush1.msra.mxu0 0.0
    %112 = vmatprep.subr.mxu0 0.0
    %113 = vmatpush1.msra.mxu0 0.0
    %114 = vmatprep.subr.mxu0 0.0
    %115 = vmatpush1.msra.mxu0 0.0
    %116 = vmatprep.subr.mxu0 0.0
    %117 = vmatpush1.msra.mxu0 0.0
    %118 = vmatprep.subr.mxu0 0.0
    %119 = vmatpush1.msra.mxu0 0.0
    %120 = vmatprep.subr.mxu0 0.0
    %121 = vmatpush1.msra.mxu0 0.0
    %122 = vmatprep.subr.mxu0 0.0
    %123 = vmatpush1.msra.mxu0 0.0
    %124 = vmatprep.subr.mxu0 0.0
    %125 = vmatpush1.msra.mxu0 0.0
    %126 = vmatprep.subr.mxu0 0.0
    %127 = vmatpush1.msra.mxu0 0.0
    %128 = vmatprep.subr.mxu0 0.0
    %129 = vmatpush1.msra.mxu0 0.0
    %130 = vmatprep.subr.mxu0 0.0
    %131 = vmatpush1.msra.mxu0 0.0
    %132 = vmatprep.subr.mxu0 0.0
    %133 = vmatpush1.msra.mxu0 0.0
    %134 = vmatprep.subr.mxu0 0.0
    %135 = vmatpush1.msra.mxu0 0.0
    %136 = vmatprep.subr.mxu0 0.0
    %137 = vmatpush1.msra.mxu0 0.0
    %138 = vmatprep.subr.mxu0 0.0
    %139 = vmatpush1.msra.mxu0 0.0
    %140 = vmatprep.subr.mxu0 0.0
    %141 = vmatpush1.msra.mxu0 0.0
    %142 = vmatprep.subr.mxu0 0.0
    %143 = vmatpush1.msra.mxu0 0.0
    %144 = vmatprep.subr.mxu0 0.0
    %145 = vmatpush1.msra.mxu0 0.0
    %146 = vmatprep.subr.mxu0 0.0
    %147 = vmatpush1.msra.mxu0 0.0
    %148 = vmatprep.subr.mxu0 0.0
    %149 = vmatpush1.msra.mxu0 0.0
    %150 = vmatprep.subr.mxu0 0.0
    %151 = vmatpush1.msra.mxu0 0.0
    %152 = vmatprep.subr.mxu0 0.0
    %153 = vmatpush1.msra.mxu0 0.0
    %154 = vmatprep.subr.mxu0 0.0
    %155 = vmatpush1.msra.mxu0 0.0
    %156 = vmatprep.subr.mxu0 0.0
    %157 = vmatpush1.msra.mxu0 0.0
    %158 = vmatprep.subr.mxu0 0.0
    %159 = vmatpush1.msra.mxu0 0.0
    %160 = vmatprep.subr.mxu0 0.0
    %161 = vmatpush1.msra.mxu0 0.0
    %162 = vmatprep.mubr.f32.mxu0 0.0
    %163 = vmatmul.mubr.f32.gmra.mrb[0].mxu0 %v75
    %v164 = vpop.f32.mrb[0].mxu0
    %v165 = vadd.f32 %v71, %v164
    %v166 = vpop.f32.mrb[0].mxu0
    %167 = vmatprep.mubr.f32.mxu0 0.0
    %168 = vmatmul.mubr.f32.gmra.mrb[0].mxu0 %v78
    %v169 = vpop.f32.mrb[0].mxu0
    %v170 = vadd.f32 %v71, %v169
    %v171 = vpop.f32.mrb[0].mxu0
    %172 = vmatprep.mubr.f32.mxu0 0.0
    %173 = vmatmul.mubr.f32.gmra.mrb[0].mxu0 %v81
    %v174 = vpop.f32.mrb[0].mxu0
    %v175 = vadd.f32 %v71, %v174
    %v176 = vpop.f32.mrb[0].mxu0
    %177 = vmatprep.mubr.f32.mxu0 0.0
    %178 = vmatmul.mubr.f32.gmra.mrb[0].mxu0 %v84
    %v179 = vpop.f32.mrb[0].mxu0
    %v180 = vadd.f32 %v71, %v179
    %v181 = vpop.f32.mrb[0].mxu0
    %182 = vmatprep.mubr.f32.mxu0 0.0
    %183 = vmatmul.mubr.f32.gmra.mrb[0].mxu0 %v87
    %v184 = vpop.f32.mrb[0].mxu0
    %v185 = vadd.f32 %v71, %v184
    %v186 = vpop.f32.mrb[0].mxu0
    %187 = vmatprep.mubr.f32.mxu0 0.0
    %188 = vmatmul.mubr.f32.gmra.mrb[0].mxu0 %v90
    %v189 = vpop.f32.mrb[0].mxu0
    %v190 = vadd.f32 %v71, %v189
    %v191 = vpop.f32.mrb[0].mxu0
    %192 = vmatprep.mubr.f32.mxu0 0.0
    %193 = vmatmul.mubr.f32.gmra.mrb[0].mxu0 %v93
    %v194 = vpop.f32.mrb[0].mxu0
    %v195 = vadd.f32 %v71, %v194
    %v196 = vpop.f32.mrb[0].mxu0
    %197 = vmatprep.mubr.f32.mxu0 0.0
    %198 = vmatmul.mubr.f32.gmra.mrb[0].mxu0 %v96
    %v199 = vpop.f32.mrb[0].mxu0
    %v200 = vadd.f32 %v71, %v199
    %v201 = vpop.f32.mrb[0].mxu0
    %202 = vdwg.mxu0
    %v203 = vtanh.pop %v165
    %v204 = vtanh.pop %v170
    %v205 = vtanh.pop %v175
    %v206 = vtanh.pop %v180
    %v207 = vtanh.pop %v185
    %v208 = vtanh.pop %v190
    %v209 = vtanh.pop %v195
    %v210 = vtanh.pop %v200
    %v211 = vld [vmem:[%s3] sm:$0x1]
    %v213 = vlaneseq
    %v214 = vshrl.u32 %v213, 7
    %v215 = vsub.s32 0, %v214
    %v216 = vrot.slane %v211, %v215
    %v218 = vmul.f32 %v203, %v216
    %v219 = vmul.f32 %v204, %v216
    %v220 = vmul.f32 %v205, %v216
    %v221 = vmul.f32 %v206, %v216
    %v222 = vmul.f32 %v207, %v216
    %v223 = vmul.f32 %v208, %v216
    %v224 = vmul.f32 %v209, %v216
    %v225 = vmul.f32 %v210, %v216
    %v226 = vsel %vm73, %v218, 0.0
    %227 = vadd.xlane.f32.xlu0 %v226
    %v228 = vpop.xlane.xlu0 %227
    %v229 = vsel %vm73, %v219, 0.0
    %230 = vadd.xlane.f32.xlu0 %v229
    %v231 = vpop.xlane.xlu0 %230
    %v232 = vsel %vm73, %v220, 0.0
    %233 = vadd.xlane.f32.xlu0 %v232
    %v234 = vpop.xlane.xlu0 %233
    %v235 = vsel %vm73, %v221, 0.0
    %236 = vadd.xlane.f32.xlu0 %v235
    %v237 = vpop.xlane.xlu0 %236
    %v238 = vsel %vm73, %v222, 0.0
    %239 = vadd.xlane.f32.xlu0 %v238
    %v240 = vpop.xlane.xlu0 %239
    %v241 = vsel %vm73, %v223, 0.0
    %242 = vadd.xlane.f32.xlu0 %v241
    %v243 = vpop.xlane.xlu0 %242
    %v244 = vsel %vm73, %v224, 0.0
    %245 = vadd.xlane.f32.xlu0 %v244
    %v246 = vpop.xlane.xlu0 %245
    %v247 = vsel %vm73, %v225, 0.0
    %248 = vadd.xlane.f32.xlu0 %v247
    %v249 = vpop.xlane.xlu0 %248
    %v250 = vld [vmem:[#allocation2] sm:$0x1]
    %v252 = vlaneseq
    %v253 = vshrl.u32 %v252, 7
    %v254 = vsub.s32 0, %v253
    %v255 = vrot.slane %v250, %v254
    %v257 = vadd.f32 %v228, %v255
    %v258 = vadd.f32 %v231, %v255
    %v259 = vadd.f32 %v234, %v255
    %v260 = vadd.f32 %v237, %v255
    %v261 = vadd.f32 %v240, %v255
    %v262 = vadd.f32 %v243, %v255
    %v263 = vadd.f32 %v246, %v255
    %v264 = vadd.f32 %v249, %v255
    %vm265 = vcmask 7168
    %v266 = vsel %vm265, %v257, -inf
    %v267 = vrot.slane %v266, 4
    %v268 = vmax.f32 %v266, %v267
    %v269 = vrot.slane %v268, 2
    %v270 = vmax.f32 %v268, %v269
    %v271 = vrot.slane %v270, 1
    %v272 = vmax.f32 %v270, %v271
    %v273 = vsel %vm265, %v258, -inf
    %v274 = vrot.slane %v273, 4
    %v275 = vmax.f32 %v273, %v274
    %v276 = vrot.slane %v275, 2
    %v277 = vmax.f32 %v275, %v276
    %v278 = vrot.slane %v277, 1
    %v279 = vmax.f32 %v277, %v278
    %v280 = vsel %vm265, %v259, -inf
    %v281 = vrot.slane %v280, 4
    %v282 = vmax.f32 %v280, %v281
    %v283 = vrot.slane %v282, 2
    %v284 = vmax.f32 %v282, %v283
    %v285 = vrot.slane %v284, 1
    %v286 = vmax.f32 %v284, %v285
    %v287 = vsel %vm265, %v260, -inf
    %v288 = vrot.slane %v287, 4
    %v289 = vmax.f32 %v287, %v288
    %v290 = vrot.slane %v289, 2
    %v291 = vmax.f32 %v289, %v290
    %v292 = vrot.slane %v291, 1
    %v293 = vmax.f32 %v291, %v292
    %v294 = vsel %vm265, %v261, -inf
    %v295 = vrot.slane %v294, 4
    %v296 = vmax.f32 %v294, %v295
    %v297 = vrot.slane %v296, 2
    %v298 = vmax.f32 %v296, %v297
    %v299 = vrot.slane %v298, 1
    %v300 = vmax.f32 %v298, %v299
    %v301 = vsel %vm265, %v262, -inf
    %v302 = vrot.slane %v301, 4
    %v303 = vmax.f32 %v301, %v302
    %v304 = vrot.slane %v303, 2
    %v305 = vmax.f32 %v303, %v304
    %v306 = vrot.slane %v305, 1
    %v307 = vmax.f32 %v305, %v306
    %v308 = vsel %vm265, %v263, -inf
    %v309 = vrot.slane %v308, 4
    %v310 = vmax.f32 %v308, %v309
    %v311 = vrot.slane %v310, 2
    %v312 = vmax.f32 %v310, %v311
    %v313 = vrot.slane %v312, 1
    %v314 = vmax.f32 %v312, %v313
    %v315 = vsel %vm265, %v264, -inf
    %v316 = vrot.slane %v315, 4
    %v317 = vmax.f32 %v315, %v316
    %v318 = vrot.slane %v317, 2
    %v319 = vmax.f32 %v317, %v318
    %v320 = vrot.slane %v319, 1
    %v321 = vmax.f32 %v319, %v320
    %v322 = vsub.f32 %v257, %v272
    %v323 = vsub.f32 %v258, %v279
    %v324 = vsub.f32 %v259, %v286
    %v325 = vsub.f32 %v260, %v293
    %v326 = vsub.f32 %v261, %v300
    %v327 = vsub.f32 %v262, %v307
    %v328 = vsub.f32 %v263, %v314
    %v329 = vsub.f32 %v264, %v321
    %v330 = vmul.f32 %v322, 1.442695
    %v331 = vpow.pop %v330
    %v332 = vmul.f32 %v323, 1.442695
    %v333 = vpow.pop %v332
    %v334 = vmul.f32 %v324, 1.442695
    %v335 = vpow.pop %v334
    %v336 = vmul.f32 %v325, 1.442695
    %v337 = vpow.pop %v336
    %v338 = vmul.f32 %v326, 1.442695
    %v339 = vpow.pop %v338
    %v340 = vmul.f32 %v327, 1.442695
    %v341 = vpow.pop %v340
    %v342 = vmul.f32 %v328, 1.442695
    %v343 = vpow.pop %v342
    %v344 = vmul.f32 %v329, 1.442695
    %v345 = vpow.pop %v344
    %v346 = vsel %vm265, %v331, 0.0
    %v347 = vrot.slane %v346, 4
    %v348 = vadd.f32 %v346, %v347
    %v349 = vrot.slane %v348, 2
    %v350 = vadd.f32 %v348, %v349
    %v351 = vrot.slane %v350, 1
    %v352 = vadd.f32 %v350, %v351
    %v353 = vsel %vm265, %v333, 0.0
    %v354 = vrot.slane %v353, 4
    %v355 = vadd.f32 %v353, %v354
    %v356 = vrot.slane %v355, 2
    %v357 = vadd.f32 %v355, %v356
    %v358 = vrot.slane %v357, 1
    %v359 = vadd.f32 %v357, %v358
    %v360 = vsel %vm265, %v335, 0.0
    %v361 = vrot.slane %v360, 4
    %v362 = vadd.f32 %v360, %v361
    %v363 = vrot.slane %v362, 2
    %v364 = vadd.f32 %v362, %v363
    %v365 = vrot.slane %v364, 1
    %v366 = vadd.f32 %v364, %v365
    %v367 = vsel %vm265, %v337, 0.0
    %v368 = vrot.slane %v367, 4
    %v369 = vadd.f32 %v367, %v368
    %v370 = vrot.slane %v369, 2
    %v371 = vadd.f32 %v369, %v370
    %v372 = vrot.slane %v371, 1
    %v373 = vadd.f32 %v371, %v372
    %v374 = vsel %vm265, %v339, 0.0
    %v375 = vrot.slane %v374, 4
    %v376 = vadd.f32 %v374, %v375
    %v377 = vrot.slane %v376, 2
    %v378 = vadd.f32 %v376, %v377
    %v379 = vrot.slane %v378, 1
    %v380 = vadd.f32 %v378, %v379
    %v381 = vsel %vm265, %v341, 0.0
    %v382 = vrot.slane %v381, 4
    %v383 = vadd.f32 %v381, %v382
    %v384 = vrot.slane %v383, 2
    %v385 = vadd.f32 %v383, %v384
    %v386 = vrot.slane %v385, 1
    %v387 = vadd.f32 %v385, %v386
    %v388 = vsel %vm265, %v343, 0.0
    %v389 = vrot.slane %v388, 4
    %v390 = vadd.f32 %v388, %v389
    %v391 = vrot.slane %v390, 2
    %v392 = vadd.f32 %v390, %v391
    %v393 = vrot.slane %v392, 1
    %v394 = vadd.f32 %v392, %v393
    %v395 = vsel %vm265, %v345, 0.0
    %v396 = vrot.slane %v395, 4
    %v397 = vadd.f32 %v395, %v396
    %v398 = vrot.slane %v397, 2
    %v399 = vadd.f32 %v397, %v398
    %v400 = vrot.slane %v399, 1
    %v401 = vadd.f32 %v399, %v400
    %v402 = vrcp.pop %v352
    %v403 = vmul.f32 1.0, %v402
    %v404 = vrcp.pop %v359
    %v405 = vmul.f32 1.0, %v404
    %v406 = vrcp.pop %v366
    %v407 = vmul.f32 1.0, %v406
    %v408 = vrcp.pop %v373
    %v409 = vmul.f32 1.0, %v408
    %v410 = vrcp.pop %v380
    %v411 = vmul.f32 1.0, %v410
    %v412 = vrcp.pop %v387
    %v413 = vmul.f32 1.0, %v412
    %v414 = vrcp.pop %v394
    %v415 = vmul.f32 1.0, %v414
    %v416 = vrcp.pop %v401
    %v417 = vmul.f32 1.0, %v416
    %v418 = vmul.f32 %v331, %v403
    %v419 = vmul.f32 %v333, %v405
    %v420 = vmul.f32 %v335, %v407
    %v421 = vmul.f32 %v337, %v409
    %v422 = vmul.f32 %v339, %v411
    %v423 = vmul.f32 %v341, %v413
    %v424 = vmul.f32 %v343, %v415
    %v425 = vmul.f32 %v345, %v417
    %434 = vset.pattern.permute.xlu0 0
    %435 = vperm.xlu0 %434, %v418
    %v436 = vpop.permute.xlu0 %435
    %437 = vset.pattern.permute.xlu0 0
    %438 = vperm.xlu0 %437, %v419
    %v439 = vpop.permute.xlu0 %438
    %440 = vset.pattern.permute.xlu0 0
    %441 = vperm.xlu0 %440, %v420
    %v442 = vpop.permute.xlu0 %441
    %443 = vset.pattern.permute.xlu0 0
    %444 = vperm.xlu0 %443, %v421
    %v445 = vpop.permute.xlu0 %444
    %446 = vset.pattern.permute.xlu0 0
    %447 = vperm.xlu0 %446, %v422
    %v448 = vpop.permute.xlu0 %447
    %449 = vset.pattern.permute.xlu0 0
    %450 = vperm.xlu0 %449, %v423
    %v451 = vpop.permute.xlu0 %450
    %452 = vset.pattern.permute.xlu0 0
    %453 = vperm.xlu0 %452, %v424
    %v454 = vpop.permute.xlu0 %453
    %455 = vset.pattern.permute.xlu0 0
    %456 = vperm.xlu0 %455, %v425
    %v457 = vpop.permute.xlu0 %456
    %v458 = vlaneseq
    %v459 = vand.u32 %v458, 127
    %v460 = vlaneseq
    %v461 = vshrl.u32 %v460, 7
    %v462 = vsub.s32 %v459, %v461
    %v463 = vrot.slane %v436, %v462
    %v464 = vlaneseq
    %v465 = vshrl.u32 %v464, 7
    %v466 = vsub.s32 %v459, %v465
    %v467 = vrot.slane %v439, %v466
    %v468 = vlaneseq
    %v469 = vshrl.u32 %v468, 7
    %v470 = vsub.s32 %v459, %v469
    %v471 = vrot.slane %v442, %v470
    %v472 = vlaneseq
    %v473 = vshrl.u32 %v472, 7
    %v474 = vsub.s32 %v459, %v473
    %v475 = vrot.slane %v445, %v474
    %v476 = vlaneseq
    %v477 = vshrl.u32 %v476, 7
    %v478 = vsub.s32 %v459, %v477
    %v479 = vrot.slane %v448, %v478
    %v480 = vlaneseq
    %v481 = vshrl.u32 %v480, 7
    %v482 = vsub.s32 %v459, %v481
    %v483 = vrot.slane %v451, %v482
    %v484 = vlaneseq
    %v485 = vshrl.u32 %v484, 7
    %v486 = vsub.s32 %v459, %v485
    %v487 = vrot.slane %v454, %v486
    %v488 = vlaneseq
    %v489 = vshrl.u32 %v488, 7
    %v490 = vsub.s32 %v459, %v489
    %v491 = vrot.slane %v457, %v490
    %vm492 = vcmask 1041409
    %v493 = vsel %vm492, %v467, %v463
    %vm494 = vcmask 1042434
    %v495 = vsel %vm494, %v471, %v493
    %vm496 = vcmask 1043459
    %v497 = vsel %vm496, %v475, %v495
    %vm498 = vcmask 1044484
    %v499 = vsel %vm498, %v479, %v497
    %vm500 = vcmask 1045509
    %v501 = vsel %vm500, %v483, %v499
    %vm502 = vcmask 1046534
    %v503 = vsel %vm502, %v487, %v501
    %vm504 = vcmask 1047559
    %v505 = vsel %vm504, %v491, %v503
    %vm507 = vcmask 64512
    %508 = vst.msk [vmem:[#allocation9] sm:$0xff] %vm507, %v505
    %510 = vset.pattern.permute.xlu0 0
    %511 = vperm.xlu0 %510, %v331
    %v512 = vpop.permute.xlu0 %511
    %515 = vset.pattern.permute.xlu0 0
    %516 = vperm.xlu0 %515, %v333
    %v517 = vpop.permute.xlu0 %516
    %520 = vset.pattern.permute.xlu0 0
    %521 = vperm.xlu0 %520, %v335
    %v522 = vpop.permute.xlu0 %521
    %525 = vset.pattern.permute.xlu0 0
    %526 = vperm.xlu0 %525, %v337
    %v527 = vpop.permute.xlu0 %526
    %530 = vset.pattern.permute.xlu0 0
    %531 = vperm.xlu0 %530, %v339
    %v532 = vpop.permute.xlu0 %531
    %535 = vset.pattern.permute.xlu0 0
    %536 = vperm.xlu0 %535, %v341
    %v537 = vpop.permute.xlu0 %536
    %540 = vset.pattern.permute.xlu0 0
    %541 = vperm.xlu0 %540, %v343
    %v542 = vpop.permute.xlu0 %541
    %545 = vset.pattern.permute.xlu0 0
    %546 = vperm.xlu0 %545, %v345
    %v547 = vpop.permute.xlu0 %546
    %v549 = vmul.f32 %v54, %v512
    %v550 = vmul.f32 %v55, %v517
    %v551 = vmul.f32 %v56, %v522
    %v552 = vmul.f32 %v57, %v527
    %v553 = vmul.f32 %v58, %v532
    %v554 = vmul.f32 %v59, %v537
    %v555 = vmul.f32 %v60, %v542
    %v556 = vmul.f32 %v61, %v547
    %v557 = vsel %vm73, %v549, 0.0
    %v558 = vrot.slane %v557, 4
    %v559 = vadd.f32 %v557, %v558
    %v560 = vrot.slane %v559, 2
    %v561 = vadd.f32 %v559, %v560
    %v562 = vrot.slane %v561, 1
    %v563 = vadd.f32 %v561, %v562
    %v564 = vsel %vm73, %v550, 0.0
    %v565 = vrot.slane %v564, 4
    %v566 = vadd.f32 %v564, %v565
    %v567 = vrot.slane %v566, 2
    %v568 = vadd.f32 %v566, %v567
    %v569 = vrot.slane %v568, 1
    %v570 = vadd.f32 %v568, %v569
    %v571 = vsel %vm73, %v551, 0.0
    %v572 = vrot.slane %v571, 4
    %v573 = vadd.f32 %v571, %v572
    %v574 = vrot.slane %v573, 2
    %v575 = vadd.f32 %v573, %v574
    %v576 = vrot.slane %v575, 1
    %v577 = vadd.f32 %v575, %v576
    %v578 = vsel %vm73, %v552, 0.0
    %v579 = vrot.slane %v578, 4
    %v580 = vadd.f32 %v578, %v579
    %v581 = vrot.slane %v580, 2
    %v582 = vadd.f32 %v580, %v581
    %v583 = vrot.slane %v582, 1
    %v584 = vadd.f32 %v582, %v583
    %v585 = vsel %vm73, %v553, 0.0
    %v586 = vrot.slane %v585, 4
    %v587 = vadd.f32 %v585, %v586
    %v588 = vrot.slane %v587, 2
    %v589 = vadd.f32 %v587, %v588
    %v590 = vrot.slane %v589, 1
    %v591 = vadd.f32 %v589, %v590
    %v592 = vsel %vm73, %v554, 0.0
    %v593 = vrot.slane %v592, 4
    %v594 = vadd.f32 %v592, %v593
    %v595 = vrot.slane %v594, 2
    %v596 = vadd.f32 %v594, %v595
    %v597 = vrot.slane %v596, 1
    %v598 = vadd.f32 %v596, %v597
    %v599 = vsel %vm73, %v555, 0.0
    %v600 = vrot.slane %v599, 4
    %v601 = vadd.f32 %v599, %v600
    %v602 = vrot.slane %v601, 2
    %v603 = vadd.f32 %v601, %v602
    %v604 = vrot.slane %v603, 1
    %v605 = vadd.f32 %v603, %v604
    %v606 = vsel %vm73, %v556, 0.0
    %v607 = vrot.slane %v606, 4
    %v608 = vadd.f32 %v606, %v607
    %v609 = vrot.slane %v608, 2
    %v610 = vadd.f32 %v608, %v609
    %v611 = vrot.slane %v610, 1
    %v612 = vadd.f32 %v610, %v611
    %614 = vset.pattern.permute.xlu0 0
    %615 = vperm.xlu0 %614, %v403
    %v616 = vpop.permute.xlu0 %615
    %619 = vset.pattern.permute.xlu0 0
    %620 = vperm.xlu0 %619, %v405
    %v621 = vpop.permute.xlu0 %620
    %624 = vset.pattern.permute.xlu0 0
    %625 = vperm.xlu0 %624, %v407
    %v626 = vpop.permute.xlu0 %625
    %629 = vset.pattern.permute.xlu0 0
    %630 = vperm.xlu0 %629, %v409
    %v631 = vpop.permute.xlu0 %630
    %634 = vset.pattern.permute.xlu0 0
    %635 = vperm.xlu0 %634, %v411
    %v636 = vpop.permute.xlu0 %635
    %639 = vset.pattern.permute.xlu0 0
    %640 = vperm.xlu0 %639, %v413
    %v641 = vpop.permute.xlu0 %640
    %644 = vset.pattern.permute.xlu0 0
    %645 = vperm.xlu0 %644, %v415
    %v646 = vpop.permute.xlu0 %645
    %649 = vset.pattern.permute.xlu0 0
    %650 = vperm.xlu0 %649, %v417
    %v651 = vpop.permute.xlu0 %650
    %v653 = vmul.f32 %v563, %v616
    %v654 = vmul.f32 %v570, %v621
    %v655 = vmul.f32 %v577, %v626
    %v656 = vmul.f32 %v584, %v631
    %v657 = vmul.f32 %v591, %v636
    %v658 = vmul.f32 %v598, %v641
    %v659 = vmul.f32 %v605, %v646
    %v660 = vmul.f32 %v612, %v651
    %v669 = vsel %vm492, %v654, %v653
    %v670 = vsel %vm494, %v655, %v669
    %v671 = vsel %vm496, %v656, %v670
    %v672 = vsel %vm498, %v657, %v671
    %v673 = vsel %vm500, %v658, %v672
    %v674 = vsel %vm502, %v659, %v673
    %v675 = vsel %vm504, %v660, %v674
    %677 = vst.msk [vmem:[#allocation8] sm:$0xff] %vm73, %v675
    // Predicated region
    $region30: #{tpu_custom_call.1} parent=1 // pred_check
      _
    $region31: #{tpu_custom_call.1} parent=1 // pred_check_branch
      %679 = sbr.rel (0) target = $region33
    $region32: #{tpu_custom_call.1} parent=1 // pred_region
      %s681 = ssub.s32 128, 128
      %682 = vsyncadd [#allocation5], %s681
      %s684 = sshll.u32 [#allocation8], 4
      %s685 = int_to_ptr.vmem [resolvable:$true] %s684
      %687 = dma.vmem_to_hbm [thread:$0]  %s685, 128, %s5, [#allocation5]
    $region33: #{tpu_custom_call.1} parent=1 // pred_fallthru
      _
    // Predicated region
    $region34: #{tpu_custom_call.1} parent=1 // pred_check
      _
    $region35: #{tpu_custom_call.1} parent=1 // pred_check_branch
      %689 = sbr.rel (0) target = $region37
    $region36: #{tpu_custom_call.1} parent=1 // pred_region
      %s691 = ssub.s32 128, 128
      %692 = vsyncadd [#allocation10], %s691
      %s694 = sshll.u32 [#allocation9], 4
      %s695 = int_to_ptr.vmem [resolvable:$true] %s694
      %697 = dma.vmem_to_hbm [thread:$0]  %s695, 128, %s6, [#allocation10]
    $region37: #{tpu_custom_call.1} parent=1 // pred_fallthru
      _
    // Predicated region
    $region38: #{tpu_custom_call.1} parent=1 // pred_check
      _
    $region39: #{tpu_custom_call.1} parent=1 // pred_check_branch
      %699 = sbr.rel (0) target = $region41
    $region40: #{tpu_custom_call.1} parent=1 // pred_region
      %700 = dma.done [#allocation5], 128
    $region41: #{tpu_custom_call.1} parent=1 // pred_fallthru
      _
    // Predicated region
    $region42: #{tpu_custom_call.1} parent=1 // pred_check
      _
    $region43: #{tpu_custom_call.1} parent=1 // pred_check_branch
      %702 = sbr.rel (0) target = $region45
    $region44: #{tpu_custom_call.1} parent=1 // pred_region
      %703 = dma.done [#allocation10], 128
    $region45: #{tpu_custom_call.1} parent=1 // pred_fallthru
      _
    %704 = vsyncpa [#allocation4], 1
    %705 = vsyncpa [#allocation7], 1
    %706 = vsyncpa [#allocation5], 1
    %707 = vsyncpa [#allocation10], 1

</llo_original>
